<compile_context>
chip_gen: v7x
topology: tpu7x:2x2x1
jax: 0.10.0
libtpu: 0.0.40
codegen_flags: <defaults>
</compile_context>

<pallas_src>
import functools

import jax
import jax.numpy as jnp
import numpy as np
from jax import lax
from jax.experimental import pallas as pl
from jax.experimental.pallas import tpu as pltpu


# ----------------------------------------------------------------------------
# Fused decoder kernel
# ----------------------------------------------------------------------------
def _decoder_kernel(ids_ref, emb_ref, wih_ref, whh_ref, blstm_ref,
                    hc0_ref, enc_ref, wpack_ref, bpack_ref, w2_ref, b2_ref,
                    out_ref, hcT_ref, hs_ref):
    f32 = jnp.float32
    TB = ids_ref.shape[0]
    vocab = emb_ref.shape[0]
    H = whh_ref.shape[0]
    B = hc0_ref.shape[1]
    T = TB // B
    BS = enc_ref.shape[0]
    S = BS // B

    # ---- embedding lookup fused in-kernel: one-hot @ table on the MXU ------
    # TODO(synk): for realistic vocab/hidden sizes keep the table in HBM
    # (memory_space=pl.ANY), DMA-gather only the T*B needed rows via
    # scalar-prefetched ids, and tile dense2/softmax over V.
    ids = ids_ref[...]                                            # (T*B, 1) i32
    lanes = lax.broadcasted_iota(jnp.int32, (TB, vocab), 1)
    onehot = (lanes == ids).astype(f32)                           # (T*B, V)
    emb_all = jnp.dot(onehot, emb_ref[...],
                      preferred_element_type=f32)                 # (T*B, E)

    # ---- fused input projection for ALL timesteps (+ combined bias) --------
    xg_all = (jnp.dot(emb_all, wih_ref[...], preferred_element_type=f32)
              + blstm_ref[...])                                   # (T*B, 4H)

    # ---- LSTM recurrence: ONE fused (B,H) x (H,4H) matmul per timestep -----
    # PyTorch gate order (i, f, g, o) along the 4H axis.
    whh = whh_ref[...]                                            # (H, 4H)
    h = hc0_ref[0]                                                # (B, H)
    c = hc0_ref[1]                                                # (B, H)
    for t in range(T):                                            # T small, static
        gates = xg_all[t * B:(t + 1) * B, :] + jnp.dot(
            h, whh, preferred_element_type=f32)                   # (B, 4H)
        i_g = jax.nn.sigmoid(gates[:, 0 * H:1 * H])
        f_g = jax.nn.sigmoid(gates[:, 1 * H:2 * H])
        g_g = jnp.tanh(gates[:, 2 * H:3 * H])
        o_g = jax.nn.sigmoid(gates[:, 3 * H:4 * H])
        c = f_g * c + i_g * g_g
        h = o_g * jnp.tanh(c)
        hs_ref[t] = h                                             # (B, H) row
    hcT_ref[0] = h
    hcT_ref[1] = c

    # ---- attention: batched pre-projection, per-b score/context ------------
    enc2d = enc_ref[...]                                          # (B*S, H) b-major
    wpack = wpack_ref[...]                                        # (3, H, H)
    watt, w1a, w1b = wpack[0], wpack[1], wpack[2]
    bpack = bpack_ref[...]                                        # (2, H)
    batt = bpack[0:1, :]
    b1 = bpack[1:2, :]

    d_enc_all = jnp.dot(enc2d, watt, preferred_element_type=f32) + batt

    hs_all = hs_ref[...]                                          # (T, B, H)
    ctx_rows = []
    tgt_rows = []
    for b in range(B):
        tgt_b = hs_all[:, b, :]                                   # (T, H)
        enc_b = enc2d[b * S:(b + 1) * S, :]                       # (S, H)
        d_enc_b = d_enc_all[b * S:(b + 1) * S, :]                 # (S, H)
        # score[t, s] = <tgt_b[t], d_enc_b[s]> : contraction on H, no transpose
        score = lax.dot_general(tgt_b, d_enc_b, (((1,), (1,)), ((), ())),
                                preferred_element_type=f32)       # (T, S)
        score = score - jnp.max(score, axis=-1, keepdims=True)
        p = jnp.exp(score)
        attn = p * pl.reciprocal(jnp.sum(p, axis=-1, keepdims=True),
                                 approx=True)
        ctx_rows.append(jnp.dot(attn, enc_b, preferred_element_type=f32))
        tgt_rows.append(tgt_b)
    ctx_all = jnp.concatenate(ctx_rows, axis=0)                   # (B*T, H)
    tgt_all = jnp.concatenate(tgt_rows, axis=0)                   # (B*T, H)

    # ---- dense1/tanh + dense2/softmax batched over all B*T rows ------------
    h1 = jnp.tanh(jnp.dot(ctx_all, w1a, preferred_element_type=f32)
                  + jnp.dot(tgt_all, w1b, preferred_element_type=f32) + b1)
    logits = jnp.dot(h1, w2_ref[...], preferred_element_type=f32) + b2_ref[...]
    logits = logits - jnp.max(logits, axis=-1, keepdims=True)
    e = jnp.exp(logits)
    probs = e * pl.reciprocal(jnp.sum(e, axis=-1, keepdims=True),
                              approx=True)                        # (B*T, V)

    # single repack to the lane-dense (T, B*V) slab (B*V = 128 at defaults):
    #   out[t, b*V:(b+1)*V] = probs[b*T + t, :]
    out_ref[...] = jnp.concatenate(
        [probs[b * T:(b + 1) * T, :] for b in range(B)], axis=-1)


# ----------------------------------------------------------------------------
# Wrapper
# ----------------------------------------------------------------------------
def decoder_forward(params, x, encoder_output, encoder_state):
    T, B = x.shape
    S = encoder_output.shape[0]
    vocab, E = params["embedding"].shape
    H = params["w_hh"].shape[1]
    V = params["w2"].shape[0]

    # Fused / transposed weight layouts.  Under jit(partial(decoder_forward,
    # params)) these are compile-time constants and get folded away.
    wih_f = params["w_ih"].T                                        # (E, 4H)
    whh_f = params["w_hh"].T                                        # (H, 4H)
    blstm = (params["b_ih"] + params["b_hh"]).reshape(1, 4 * H)      # (1, 4H)
    wpack = jnp.stack([params["w_att"].T,
                       params["w1"][:, :H].T,
                       params["w1"][:, H:].T], axis=0)               # (3, H, H)
    bpack = jnp.stack([params["b_att"], params["b1"]], axis=0)       # (2, H)
    w2_t = params["w2"].T                                            # (H, V)
    b2 = params["b2"].reshape(1, V)                                  # (1, V)

    ids = x.reshape(T * B, 1).astype(jnp.int32)                      # t-major rows
    h0, c0 = encoder_state                                           # (1,B,H) each
    hc0 = jnp.concatenate([h0, c0], axis=0)                          # (2, B, H)
    # encoder output flattened b-major: row = b*S + s
    enc2d = jnp.transpose(encoder_output, (1, 0, 2)).reshape(B * S, H)

    def fullspec(shape):
        n = len(shape)
        return pl.BlockSpec(shape, lambda i, n=n: (0,) * n)

    grid_spec = pltpu.PrefetchScalarGridSpec(
        num_scalar_prefetch=0,
        grid=(1,),
        in_specs=[
            fullspec((T * B, 1)),        # token ids
            fullspec((vocab, E)),        # embedding table
            fullspec((E, 4 * H)),        # fused W_ih^T
            fullspec((H, 4 * H)),        # fused W_hh^T
            fullspec((1, 4 * H)),        # fused LSTM bias
            fullspec((2, B, H)),         # h0 / c0 stacked
            fullspec((B * S, H)),        # encoder output (b-major 2D)
            fullspec((3, H, H)),         # [w_att^T, w1_ctx^T, w1_lstm^T]
            fullspec((2, H)),            # [b_att, b1]
            fullspec((H, V)),            # dense2 weight (transposed)
            fullspec((1, V)),            # dense2 bias
        ],
        out_specs=[
            fullspec((T, B * V)),        # lane-dense probabilities
            fullspec((2, B, H)),         # h_T / c_T stacked
        ],
        scratch_shapes=[pltpu.VMEM((T, B, H), jnp.float32)],
    )

    # TODO(synk): for larger B/T add a "parallel" grid axis over row tiles so
    # the second TensorCore on v7x is used for the non-recurrent tail.
    out2d, hcT = pl.pallas_call(
        _decoder_kernel,
        out_shape=(jax.ShapeDtypeStruct((T, B * V), jnp.float32),
                   jax.ShapeDtypeStruct((2, B, H), jnp.float32)),
        grid_spec=grid_spec,
        compiler_params=pltpu.CompilerParams(
            dimension_semantics=("arbitrary",)),
    )(ids, params["embedding"], wih_f, whh_f, blstm, hc0, enc2d,
      wpack, bpack, w2_t, b2)

    decoder_output = out2d.reshape(T, B, V)   # free metadata reshape in HBM
    hT = hcT[0:1]
    cT = hcT[1:2]
    return decoder_output, (hT, cT)


# ----------------------------------------------------------------------------
# Pure-JAX reference (for correctness check)
# ----------------------------------------------------------------------------
def decoder_reference(params, x, encoder_output, encoder_state):
    emb = params["embedding"][x]
    h0 = encoder_state[0][0]
    c0 = encoder_state[1][0]

    def step(carry, xt):
        h, c = carry
        gates = (xt @ params["w_ih"].T + params["b_ih"]
                 + h @ params["w_hh"].T + params["b_hh"])
        i, f, g, o = jnp.split(gates, 4, axis=-1)
        i, f, o = jax.nn.sigmoid(i), jax.nn.sigmoid(f), jax.nn.sigmoid(o)
        g = jnp.tanh(g)
        c = f * c + i * g
        h = o * jnp.tanh(c)
        return (h, c), h

    (hT, cT), outs = jax.lax.scan(step, (h0, c0), emb)
    enc_b = jnp.transpose(encoder_output, (1, 0, 2))
    tgt_b = jnp.transpose(outs, (1, 0, 2))
    d_enc = enc_b @ params["w_att"].T + params["b_att"]
    score = jnp.einsum("bth,bsh->bts", tgt_b, d_enc)
    attn = jax.nn.softmax(score, axis=2)
    ctx = jnp.transpose(jnp.einsum("bts,bsh->bth", attn, enc_b), (1, 0, 2))
    cat = jnp.concatenate([ctx, outs], axis=2)
    h1 = jnp.tanh(cat @ params["w1"].T + params["b1"])
    out = jax.nn.softmax(h1 @ params["w2"].T + params["b2"], axis=2)
    return out, (hT[None], cT[None])


# ----------------------------------------------------------------------------
if __name__ == "__main__":
    V, E, H = 64, 32, 32     # vocab, embedding_dim, nhidden
    T, S, B = 8, 8, 2        # decoder len, encoder len, batch

    key = jax.random.PRNGKey(0)
    keys = jax.random.split(key, 16)

    params = {
        "embedding": 0.1 * jax.random.normal(keys[0], (V, E), jnp.float32),
        "w_ih": 0.1 * jax.random.normal(keys[1], (4 * H, E), jnp.float32),
        "w_hh": 0.1 * jax.random.normal(keys[2], (4 * H, H), jnp.float32),
        "b_ih": 0.1 * jax.random.normal(keys[3], (4 * H,), jnp.float32),
        "b_hh": 0.1 * jax.random.normal(keys[4], (4 * H,), jnp.float32),
        "w_att": 0.1 * jax.random.normal(keys[5], (H, H), jnp.float32),
        "b_att": 0.1 * jax.random.normal(keys[6], (H,), jnp.float32),
        "w1": 0.1 * jax.random.normal(keys[7], (H, 2 * H), jnp.float32),
        "b1": 0.1 * jax.random.normal(keys[8], (H,), jnp.float32),
        "w2": 0.1 * jax.random.normal(keys[9], (V, H), jnp.float32),
        "b2": 0.1 * jax.random.normal(keys[10], (V,), jnp.float32),
    }

    x = jax.random.randint(keys[11], (T, B), 0, V, dtype=jnp.int32)
    encoder_output = 0.5 * jax.random.normal(keys[12], (S, B, H), jnp.float32)
    h0 = 0.5 * jax.random.normal(keys[13], (1, B, H), jnp.float32)
    c0 = 0.5 * jax.random.normal(keys[14], (1, B, H), jnp.float32)
    encoder_state = (h0, c0)

    fwd = jax.jit(functools.partial(decoder_forward, params))
    out, state = fwd(x, encoder_output, encoder_state)
    jax.block_until_ready(out)
    jax.block_until_ready(state)

    ref_out, ref_state = decoder_reference(params, x, encoder_output,
                                           encoder_state)
    # Output tolerance is slightly looser because the kernel uses the EUP
    # approximate reciprocal for the softmax denominators.
    np.testing.assert_allclose(np.asarray(out), np.asarray(ref_out),
                               rtol=5e-3, atol=5e-4)
    np.testing.assert_allclose(np.asarray(state[0]), np.asarray(ref_state[0]),
                               rtol=1e-3, atol=1e-4)
    np.testing.assert_allclose(np.asarray(state[1]), np.asarray(ref_state[1]),
                               rtol=1e-3, atol=1e-4)

    assert out.shape == (T, B, V)
    assert state[0].shape == (1, B, H) and state[1].shape == (1, B, H)
    print("KERNEL_OK")
</pallas_src>

<mosaic_0001>
module attributes {stable_mosaic.version = 11 : i64} {
  func.func @_decoder_kernel(%arg0: i32, %arg1: memref<16x1xi32, #tpu.memory_space<vmem>>, %arg2: memref<64x32xf32, #tpu.memory_space<vmem>>, %arg3: memref<32x128xf32, #tpu.memory_space<vmem>>, %arg4: memref<32x128xf32, #tpu.memory_space<vmem>>, %arg5: memref<1x128xf32, #tpu.memory_space<vmem>>, %arg6: memref<2x2x32xf32, #tpu.memory_space<vmem>>, %arg7: memref<16x32xf32, #tpu.memory_space<vmem>>, %arg8: memref<3x32x32xf32, #tpu.memory_space<vmem>>, %arg9: memref<2x32xf32, #tpu.memory_space<vmem>>, %arg10: memref<32x64xf32, #tpu.memory_space<vmem>>, %arg11: memref<1x64xf32, #tpu.memory_space<vmem>>, %arg12: memref<8x128xf32, #tpu.memory_space<vmem>>, %arg13: memref<2x2x32xf32, #tpu.memory_space<vmem>>, %arg14: memref<8x2x32xf32, #tpu.memory_space<vmem>>) attributes {dimension_semantics = [#tpu.dimension_semantics<arbitrary>], iteration_bounds = array<i64: 1>, scalar_prefetch = 0 : i64, scratch_operands = 1 : i64, tpu.core_type = #tpu.core_type<tc>, window_params = [{pipeline_mode = #tpu.pipeline_mode<synchronous>, transform_indices = @transform_0, window_bounds = array<i64: 16, 1>}, {pipeline_mode = #tpu.pipeline_mode<synchronous>, transform_indices = @transform_1, window_bounds = array<i64: 64, 32>}, {pipeline_mode = #tpu.pipeline_mode<synchronous>, transform_indices = @transform_2, window_bounds = array<i64: 32, 128>}, {pipeline_mode = #tpu.pipeline_mode<synchronous>, transform_indices = @transform_3, window_bounds = array<i64: 32, 128>}, {pipeline_mode = #tpu.pipeline_mode<synchronous>, transform_indices = @transform_4, window_bounds = array<i64: 1, 128>}, {pipeline_mode = #tpu.pipeline_mode<synchronous>, transform_indices = @transform_5, window_bounds = array<i64: 2, 2, 32>}, {pipeline_mode = #tpu.pipeline_mode<synchronous>, transform_indices = @transform_6, window_bounds = array<i64: 16, 32>}, {pipeline_mode = #tpu.pipeline_mode<synchronous>, transform_indices = @transform_7, window_bounds = array<i64: 3, 32, 32>}, {pipeline_mode = #tpu.pipeline_mode<synchronous>, transform_indices = @transform_8, window_bounds = array<i64: 2, 32>}, {pipeline_mode = #tpu.pipeline_mode<synchronous>, transform_indices = @transform_9, window_bounds = array<i64: 32, 64>}, {pipeline_mode = #tpu.pipeline_mode<synchronous>, transform_indices = @transform_10, window_bounds = array<i64: 1, 64>}, {pipeline_mode = #tpu.pipeline_mode<synchronous>, transform_indices = @transform_11, window_bounds = array<i64: 8, 128>}, {pipeline_mode = #tpu.pipeline_mode<synchronous>, transform_indices = @transform_12, window_bounds = array<i64: 2, 2, 32>}]} {
    %c0 = arith.constant 0 : index
    %c0_0 = arith.constant 0 : index
    %0 = vector.load %arg1[%c0, %c0_0] : memref<16x1xi32, #tpu.memory_space<vmem>>, vector<16x1xi32>
    %1 = tpu.iota {dimensions = array<i32: 1>} : vector<16x64xi32>
    %2 = vector.broadcast %0 : vector<16x1xi32> to vector<16x64xi32>
    %3 = arith.cmpi eq, %1, %2 : vector<16x64xi32>
    %4 = arith.extui %3 : vector<16x64xi1> to vector<16x64xi32>
    %5 = arith.sitofp %4 : vector<16x64xi32> to vector<16x64xf32>
    %c0_1 = arith.constant 0 : index
    %c0_2 = arith.constant 0 : index
    %6 = vector.load %arg2[%c0_1, %c0_2] : memref<64x32xf32, #tpu.memory_space<vmem>>, vector<64x32xf32>
    %cst = arith.constant dense<0.000000e+00> : vector<16x32xf32>
    %7 = tpu.matmul %5, %6, %cst {dimension_numbers = #tpu.dot_dimension_numbers<[1], [0], [0], [1], [0, 0, 1, 1], [], []>} : vector<16x64xf32>, vector<64x32xf32>, vector<16x32xf32> -> vector<16x32xf32>
    %c0_3 = arith.constant 0 : index
    %c0_4 = arith.constant 0 : index
    %8 = vector.load %arg3[%c0_3, %c0_4] : memref<32x128xf32, #tpu.memory_space<vmem>>, vector<32x128xf32>
    %cst_5 = arith.constant dense<0.000000e+00> : vector<16x128xf32>
    %9 = tpu.matmul %7, %8, %cst_5 {dimension_numbers = #tpu.dot_dimension_numbers<[1], [0], [0], [1], [0, 0, 1, 1], [], []>} : vector<16x32xf32>, vector<32x128xf32>, vector<16x128xf32> -> vector<16x128xf32>
    %c0_6 = arith.constant 0 : index
    %c0_7 = arith.constant 0 : index
    %10 = vector.load %arg5[%c0_6, %c0_7] : memref<1x128xf32, #tpu.memory_space<vmem>>, vector<1x128xf32>
    %11 = vector.broadcast %10 : vector<1x128xf32> to vector<16x128xf32>
    %12 = arith.addf %9, %11 : vector<16x128xf32>
    %c0_8 = arith.constant 0 : index
    %c0_9 = arith.constant 0 : index
    %13 = vector.load %arg4[%c0_8, %c0_9] : memref<32x128xf32, #tpu.memory_space<vmem>>, vector<32x128xf32>
    %c0_10 = arith.constant 0 : index
    %c0_11 = arith.constant 0 : index
    %c0_12 = arith.constant 0 : index
    %14 = vector.load %arg6[%c0_10, %c0_11, %c0_12] : memref<2x2x32xf32, #tpu.memory_space<vmem>>, vector<1x2x32xf32>
    %15 = vector.shape_cast %14 : vector<1x2x32xf32> to vector<2x32xf32>
    %c1 = arith.constant 1 : index
    %c0_13 = arith.constant 0 : index
    %c0_14 = arith.constant 0 : index
    %16 = vector.load %arg6[%c1, %c0_13, %c0_14] : memref<2x2x32xf32, #tpu.memory_space<vmem>>, vector<1x2x32xf32>
    %17 = vector.shape_cast %16 : vector<1x2x32xf32> to vector<2x32xf32>
    %18 = vector.extract_strided_slice %12 {offsets = [0, 0], sizes = [2, 128], strides = [1, 1]} : vector<16x128xf32> to vector<2x128xf32>
    %cst_15 = arith.constant dense<0.000000e+00> : vector<2x128xf32>
    %19 = tpu.matmul %15, %13, %cst_15 {dimension_numbers = #tpu.dot_dimension_numbers<[1], [0], [0], [1], [0, 0, 1, 1], [], []>} : vector<2x32xf32>, vector<32x128xf32>, vector<2x128xf32> -> vector<2x128xf32>
    %20 = arith.addf %18, %19 : vector<2x128xf32>
    %21 = vector.extract_strided_slice %20 {offsets = [0, 0], sizes = [2, 32], strides = [1, 1]} : vector<2x128xf32> to vector<2x32xf32>
    %22 = arith.negf %21 : vector<2x32xf32>
    %23 = math.exp %22 : vector<2x32xf32>
    %cst_16 = arith.constant 1.000000e+00 : f32
    %24 = vector.broadcast %cst_16 : f32 to vector<2x32xf32>
    %25 = arith.addf %24, %23 : vector<2x32xf32>
    %26 = arith.divf %24, %25 : vector<2x32xf32>
    %27 = vector.extract_strided_slice %20 {offsets = [0, 32], sizes = [2, 32], strides = [1, 1]} : vector<2x128xf32> to vector<2x32xf32>
    %28 = arith.negf %27 : vector<2x32xf32>
    %29 = math.exp %28 : vector<2x32xf32>
    %cst_17 = arith.constant 1.000000e+00 : f32
    %30 = vector.broadcast %cst_17 : f32 to vector<2x32xf32>
    %31 = arith.addf %30, %29 : vector<2x32xf32>
    %32 = arith.divf %30, %31 : vector<2x32xf32>
    %33 = vector.extract_strided_slice %20 {offsets = [0, 64], sizes = [2, 32], strides = [1, 1]} : vector<2x128xf32> to vector<2x32xf32>
    %34 = math.tanh %33 : vector<2x32xf32>
    %35 = vector.extract_strided_slice %20 {offsets = [0, 96], sizes = [2, 32], strides = [1, 1]} : vector<2x128xf32> to vector<2x32xf32>
    %36 = arith.negf %35 : vector<2x32xf32>
    %37 = math.exp %36 : vector<2x32xf32>
    %cst_18 = arith.constant 1.000000e+00 : f32
    %38 = vector.broadcast %cst_18 : f32 to vector<2x32xf32>
    %39 = arith.addf %38, %37 : vector<2x32xf32>
    %40 = arith.divf %38, %39 : vector<2x32xf32>
    %41 = arith.mulf %32, %17 : vector<2x32xf32>
    %42 = arith.mulf %26, %34 : vector<2x32xf32>
    %43 = arith.addf %41, %42 : vector<2x32xf32>
    %44 = math.tanh %43 : vector<2x32xf32>
    %45 = arith.mulf %40, %44 : vector<2x32xf32>
    %c0_19 = arith.constant 0 : index
    %c0_20 = arith.constant 0 : index
    %c0_21 = arith.constant 0 : index
    %46 = vector.load %arg14[%c0_19, %c0_20, %c0_21] : memref<8x2x32xf32, #tpu.memory_space<vmem>>, vector<1x2x32xf32>
    %47 = vector.shape_cast %46 : vector<1x2x32xf32> to vector<2x32xf32>
    %48 = vector.shape_cast %45 : vector<2x32xf32> to vector<1x2x32xf32>
    tpu.vector_store %arg14[%c0_19, %c0_20, %c0_21], %48 {strides = array<i32>} : memref<8x2x32xf32, #tpu.memory_space<vmem>>, vector<1x2x32xf32>,
    %49 = vector.extract_strided_slice %12 {offsets = [2, 0], sizes = [2, 128], strides = [1, 1]} : vector<16x128xf32> to vector<2x128xf32>
    %cst_22 = arith.constant dense<0.000000e+00> : vector<2x128xf32>
    %50 = tpu.matmul %45, %13, %cst_22 {dimension_numbers = #tpu.dot_dimension_numbers<[1], [0], [0], [1], [0, 0, 1, 1], [], []>} : vector<2x32xf32>, vector<32x128xf32>, vector<2x128xf32> -> vector<2x128xf32>
    %51 = arith.addf %49, %50 : vector<2x128xf32>
    %52 = vector.extract_strided_slice %51 {offsets = [0, 0], sizes = [2, 32], strides = [1, 1]} : vector<2x128xf32> to vector<2x32xf32>
    %53 = arith.negf %52 : vector<2x32xf32>
    %54 = math.exp %53 : vector<2x32xf32>
    %cst_23 = arith.constant 1.000000e+00 : f32
    %55 = vector.broadcast %cst_23 : f32 to vector<2x32xf32>
    %56 = arith.addf %55, %54 : vector<2x32xf32>
    %57 = arith.divf %55, %56 : vector<2x32xf32>
    %58 = vector.extract_strided_slice %51 {offsets = [0, 32], sizes = [2, 32], strides = [1, 1]} : vector<2x128xf32> to vector<2x32xf32>
    %59 = arith.negf %58 : vector<2x32xf32>
    %60 = math.exp %59 : vector<2x32xf32>
    %cst_24 = arith.constant 1.000000e+00 : f32
    %61 = vector.broadcast %cst_24 : f32 to vector<2x32xf32>
    %62 = arith.addf %61, %60 : vector<2x32xf32>
    %63 = arith.divf %61, %62 : vector<2x32xf32>
    %64 = vector.extract_strided_slice %51 {offsets = [0, 64], sizes = [2, 32], strides = [1, 1]} : vector<2x128xf32> to vector<2x32xf32>
    %65 = math.tanh %64 : vector<2x32xf32>
    %66 = vector.extract_strided_slice %51 {offsets = [0, 96], sizes = [2, 32], strides = [1, 1]} : vector<2x128xf32> to vector<2x32xf32>
    %67 = arith.negf %66 : vector<2x32xf32>
    %68 = math.exp %67 : vector<2x32xf32>
    %cst_25 = arith.constant 1.000000e+00 : f32
    %69 = vector.broadcast %cst_25 : f32 to vector<2x32xf32>
    %70 = arith.addf %69, %68 : vector<2x32xf32>
    %71 = arith.divf %69, %70 : vector<2x32xf32>
    %72 = arith.mulf %63, %43 : vector<2x32xf32>
    %73 = arith.mulf %57, %65 : vector<2x32xf32>
    %74 = arith.addf %72, %73 : vector<2x32xf32>
    %75 = math.tanh %74 : vector<2x32xf32>
    %76 = arith.mulf %71, %75 : vector<2x32xf32>
    %c1_26 = arith.constant 1 : index
    %c0_27 = arith.constant 0 : index
    %c0_28 = arith.constant 0 : index
    %77 = vector.load %arg14[%c1_26, %c0_27, %c0_28] : memref<8x2x32xf32, #tpu.memory_space<vmem>>, vector<1x2x32xf32>
    %78 = vector.shape_cast %77 : vector<1x2x32xf32> to vector<2x32xf32>
    %79 = vector.shape_cast %76 : vector<2x32xf32> to vector<1x2x32xf32>
    tpu.vector_store %arg14[%c1_26, %c0_27, %c0_28], %79 {strides = array<i32>} : memref<8x2x32xf32, #tpu.memory_space<vmem>>, vector<1x2x32xf32>,
    %80 = vector.extract_strided_slice %12 {offsets = [4, 0], sizes = [2, 128], strides = [1, 1]} : vector<16x128xf32> to vector<2x128xf32>
    %cst_29 = arith.constant dense<0.000000e+00> : vector<2x128xf32>
    %81 = tpu.matmul %76, %13, %cst_29 {dimension_numbers = #tpu.dot_dimension_numbers<[1], [0], [0], [1], [0, 0, 1, 1], [], []>} : vector<2x32xf32>, vector<32x128xf32>, vector<2x128xf32> -> vector<2x128xf32>
    %82 = arith.addf %80, %81 : vector<2x128xf32>
    %83 = vector.extract_strided_slice %82 {offsets = [0, 0], sizes = [2, 32], strides = [1, 1]} : vector<2x128xf32> to vector<2x32xf32>
    %84 = arith.negf %83 : vector<2x32xf32>
    %85 = math.exp %84 : vector<2x32xf32>
    %cst_30 = arith.constant 1.000000e+00 : f32
    %86 = vector.broadcast %cst_30 : f32 to vector<2x32xf32>
    %87 = arith.addf %86, %85 : vector<2x32xf32>
    %88 = arith.divf %86, %87 : vector<2x32xf32>
    %89 = vector.extract_strided_slice %82 {offsets = [0, 32], sizes = [2, 32], strides = [1, 1]} : vector<2x128xf32> to vector<2x32xf32>
    %90 = arith.negf %89 : vector<2x32xf32>
    %91 = math.exp %90 : vector<2x32xf32>
    %cst_31 = arith.constant 1.000000e+00 : f32
    %92 = vector.broadcast %cst_31 : f32 to vector<2x32xf32>
    %93 = arith.addf %92, %91 : vector<2x32xf32>
    %94 = arith.divf %92, %93 : vector<2x32xf32>
    %95 = vector.extract_strided_slice %82 {offsets = [0, 64], sizes = [2, 32], strides = [1, 1]} : vector<2x128xf32> to vector<2x32xf32>
    %96 = math.tanh %95 : vector<2x32xf32>
    %97 = vector.extract_strided_slice %82 {offsets = [0, 96], sizes = [2, 32], strides = [1, 1]} : vector<2x128xf32> to vector<2x32xf32>
    %98 = arith.negf %97 : vector<2x32xf32>
    %99 = math.exp %98 : vector<2x32xf32>
    %cst_32 = arith.constant 1.000000e+00 : f32
    %100 = vector.broadcast %cst_32 : f32 to vector<2x32xf32>
    %101 = arith.addf %100, %99 : vector<2x32xf32>
    %102 = arith.divf %100, %101 : vector<2x32xf32>
    %103 = arith.mulf %94, %74 : vector<2x32xf32>
    %104 = arith.mulf %88, %96 : vector<2x32xf32>
    %105 = arith.addf %103, %104 : vector<2x32xf32>
    %106 = math.tanh %105 : vector<2x32xf32>
    %107 = arith.mulf %102, %106 : vector<2x32xf32>
    %c2 = arith.constant 2 : index
    %c0_33 = arith.constant 0 : index
    %c0_34 = arith.constant 0 : index
    %108 = vector.load %arg14[%c2, %c0_33, %c0_34] : memref<8x2x32xf32, #tpu.memory_space<vmem>>, vector<1x2x32xf32>
    %109 = vector.shape_cast %108 : vector<1x2x32xf32> to vector<2x32xf32>
    %110 = vector.shape_cast %107 : vector<2x32xf32> to vector<1x2x32xf32>
    tpu.vector_store %arg14[%c2, %c0_33, %c0_34], %110 {strides = array<i32>} : memref<8x2x32xf32, #tpu.memory_space<vmem>>, vector<1x2x32xf32>,
    %111 = vector.extract_strided_slice %12 {offsets = [6, 0], sizes = [2, 128], strides = [1, 1]} : vector<16x128xf32> to vector<2x128xf32>
    %cst_35 = arith.constant dense<0.000000e+00> : vector<2x128xf32>
    %112 = tpu.matmul %107, %13, %cst_35 {dimension_numbers = #tpu.dot_dimension_numbers<[1], [0], [0], [1], [0, 0, 1, 1], [], []>} : vector<2x32xf32>, vector<32x128xf32>, vector<2x128xf32> -> vector<2x128xf32>
    %113 = arith.addf %111, %112 : vector<2x128xf32>
    %114 = vector.extract_strided_slice %113 {offsets = [0, 0], sizes = [2, 32], strides = [1, 1]} : vector<2x128xf32> to vector<2x32xf32>
    %115 = arith.negf %114 : vector<2x32xf32>
    %116 = math.exp %115 : vector<2x32xf32>
    %cst_36 = arith.constant 1.000000e+00 : f32
    %117 = vector.broadcast %cst_36 : f32 to vector<2x32xf32>
    %118 = arith.addf %117, %116 : vector<2x32xf32>
    %119 = arith.divf %117, %118 : vector<2x32xf32>
    %120 = vector.extract_strided_slice %113 {offsets = [0, 32], sizes = [2, 32], strides = [1, 1]} : vector<2x128xf32> to vector<2x32xf32>
    %121 = arith.negf %120 : vector<2x32xf32>
    %122 = math.exp %121 : vector<2x32xf32>
    %cst_37 = arith.constant 1.000000e+00 : f32
    %123 = vector.broadcast %cst_37 : f32 to vector<2x32xf32>
    %124 = arith.addf %123, %122 : vector<2x32xf32>
    %125 = arith.divf %123, %124 : vector<2x32xf32>
    %126 = vector.extract_strided_slice %113 {offsets = [0, 64], sizes = [2, 32], strides = [1, 1]} : vector<2x128xf32> to vector<2x32xf32>
    %127 = math.tanh %126 : vector<2x32xf32>
    %128 = vector.extract_strided_slice %113 {offsets = [0, 96], sizes = [2, 32], strides = [1, 1]} : vector<2x128xf32> to vector<2x32xf32>
    %129 = arith.negf %128 : vector<2x32xf32>
    %130 = math.exp %129 : vector<2x32xf32>
    %cst_38 = arith.constant 1.000000e+00 : f32
    %131 = vector.broadcast %cst_38 : f32 to vector<2x32xf32>
    %132 = arith.addf %131, %130 : vector<2x32xf32>
    %133 = arith.divf %131, %132 : vector<2x32xf32>
    %134 = arith.mulf %125, %105 : vector<2x32xf32>
    %135 = arith.mulf %119, %127 : vector<2x32xf32>
    %136 = arith.addf %134, %135 : vector<2x32xf32>
    %137 = math.tanh %136 : vector<2x32xf32>
    %138 = arith.mulf %133, %137 : vector<2x32xf32>
    %c3 = arith.constant 3 : index
    %c0_39 = arith.constant 0 : index
    %c0_40 = arith.constant 0 : index
    %139 = vector.load %arg14[%c3, %c0_39, %c0_40] : memref<8x2x32xf32, #tpu.memory_space<vmem>>, vector<1x2x32xf32>
    %140 = vector.shape_cast %139 : vector<1x2x32xf32> to vector<2x32xf32>
    %141 = vector.shape_cast %138 : vector<2x32xf32> to vector<1x2x32xf32>
    tpu.vector_store %arg14[%c3, %c0_39, %c0_40], %141 {strides = array<i32>} : memref<8x2x32xf32, #tpu.memory_space<vmem>>, vector<1x2x32xf32>,
    %142 = vector.extract_strided_slice %12 {offsets = [8, 0], sizes = [2, 128], strides = [1, 1]} : vector<16x128xf32> to vector<2x128xf32>
    %cst_41 = arith.constant dense<0.000000e+00> : vector<2x128xf32>
    %143 = tpu.matmul %138, %13, %cst_41 {dimension_numbers = #tpu.dot_dimension_numbers<[1], [0], [0], [1], [0, 0, 1, 1], [], []>} : vector<2x32xf32>, vector<32x128xf32>, vector<2x128xf32> -> vector<2x128xf32>
    %144 = arith.addf %142, %143 : vector<2x128xf32>
    %145 = vector.extract_strided_slice %144 {offsets = [0, 0], sizes = [2, 32], strides = [1, 1]} : vector<2x128xf32> to vector<2x32xf32>
    %146 = arith.negf %145 : vector<2x32xf32>
    %147 = math.exp %146 : vector<2x32xf32>
    %cst_42 = arith.constant 1.000000e+00 : f32
    %148 = vector.broadcast %cst_42 : f32 to vector<2x32xf32>
    %149 = arith.addf %148, %147 : vector<2x32xf32>
    %150 = arith.divf %148, %149 : vector<2x32xf32>
    %151 = vector.extract_strided_slice %144 {offsets = [0, 32], sizes = [2, 32], strides = [1, 1]} : vector<2x128xf32> to vector<2x32xf32>
    %152 = arith.negf %151 : vector<2x32xf32>
    %153 = math.exp %152 : vector<2x32xf32>
    %cst_43 = arith.constant 1.000000e+00 : f32
    %154 = vector.broadcast %cst_43 : f32 to vector<2x32xf32>
    %155 = arith.addf %154, %153 : vector<2x32xf32>
    %156 = arith.divf %154, %155 : vector<2x32xf32>
    %157 = vector.extract_strided_slice %144 {offsets = [0, 64], sizes = [2, 32], strides = [1, 1]} : vector<2x128xf32> to vector<2x32xf32>
    %158 = math.tanh %157 : vector<2x32xf32>
    %159 = vector.extract_strided_slice %144 {offsets = [0, 96], sizes = [2, 32], strides = [1, 1]} : vector<2x128xf32> to vector<2x32xf32>
    %160 = arith.negf %159 : vector<2x32xf32>
    %161 = math.exp %160 : vector<2x32xf32>
    %cst_44 = arith.constant 1.000000e+00 : f32
    %162 = vector.broadcast %cst_44 : f32 to vector<2x32xf32>
    %163 = arith.addf %162, %161 : vector<2x32xf32>
    %164 = arith.divf %162, %163 : vector<2x32xf32>
    %165 = arith.mulf %156, %136 : vector<2x32xf32>
    %166 = arith.mulf %150, %158 : vector<2x32xf32>
    %167 = arith.addf %165, %166 : vector<2x32xf32>
    %168 = math.tanh %167 : vector<2x32xf32>
    %169 = arith.mulf %164, %168 : vector<2x32xf32>
    %c4 = arith.constant 4 : index
    %c0_45 = arith.constant 0 : index
    %c0_46 = arith.constant 0 : index
    %170 = vector.load %arg14[%c4, %c0_45, %c0_46] : memref<8x2x32xf32, #tpu.memory_space<vmem>>, vector<1x2x32xf32>
    %171 = vector.shape_cast %170 : vector<1x2x32xf32> to vector<2x32xf32>
    %172 = vector.shape_cast %169 : vector<2x32xf32> to vector<1x2x32xf32>
    tpu.vector_store %arg14[%c4, %c0_45, %c0_46], %172 {strides = array<i32>} : memref<8x2x32xf32, #tpu.memory_space<vmem>>, vector<1x2x32xf32>,
    %173 = vector.extract_strided_slice %12 {offsets = [10, 0], sizes = [2, 128], strides = [1, 1]} : vector<16x128xf32> to vector<2x128xf32>
    %cst_47 = arith.constant dense<0.000000e+00> : vector<2x128xf32>
    %174 = tpu.matmul %169, %13, %cst_47 {dimension_numbers = #tpu.dot_dimension_numbers<[1], [0], [0], [1], [0, 0, 1, 1], [], []>} : vector<2x32xf32>, vector<32x128xf32>, vector<2x128xf32> -> vector<2x128xf32>
    %175 = arith.addf %173, %174 : vector<2x128xf32>
    %176 = vector.extract_strided_slice %175 {offsets = [0, 0], sizes = [2, 32], strides = [1, 1]} : vector<2x128xf32> to vector<2x32xf32>
    %177 = arith.negf %176 : vector<2x32xf32>
    %178 = math.exp %177 : vector<2x32xf32>
    %cst_48 = arith.constant 1.000000e+00 : f32
    %179 = vector.broadcast %cst_48 : f32 to vector<2x32xf32>
    %180 = arith.addf %179, %178 : vector<2x32xf32>
    %181 = arith.divf %179, %180 : vector<2x32xf32>
    %182 = vector.extract_strided_slice %175 {offsets = [0, 32], sizes = [2, 32], strides = [1, 1]} : vector<2x128xf32> to vector<2x32xf32>
    %183 = arith.negf %182 : vector<2x32xf32>
    %184 = math.exp %183 : vector<2x32xf32>
    %cst_49 = arith.constant 1.000000e+00 : f32
    %185 = vector.broadcast %cst_49 : f32 to vector<2x32xf32>
    %186 = arith.addf %185, %184 : vector<2x32xf32>
    %187 = arith.divf %185, %186 : vector<2x32xf32>
    %188 = vector.extract_strided_slice %175 {offsets = [0, 64], sizes = [2, 32], strides = [1, 1]} : vector<2x128xf32> to vector<2x32xf32>
    %189 = math.tanh %188 : vector<2x32xf32>
    %190 = vector.extract_strided_slice %175 {offsets = [0, 96], sizes = [2, 32], strides = [1, 1]} : vector<2x128xf32> to vector<2x32xf32>
    %191 = arith.negf %190 : vector<2x32xf32>
    %192 = math.exp %191 : vector<2x32xf32>
    %cst_50 = arith.constant 1.000000e+00 : f32
    %193 = vector.broadcast %cst_50 : f32 to vector<2x32xf32>
    %194 = arith.addf %193, %192 : vector<2x32xf32>
    %195 = arith.divf %193, %194 : vector<2x32xf32>
    %196 = arith.mulf %187, %167 : vector<2x32xf32>
    %197 = arith.mulf %181, %189 : vector<2x32xf32>
    %198 = arith.addf %196, %197 : vector<2x32xf32>
    %199 = math.tanh %198 : vector<2x32xf32>
    %200 = arith.mulf %195, %199 : vector<2x32xf32>
    %c5 = arith.constant 5 : index
    %c0_51 = arith.constant 0 : index
    %c0_52 = arith.constant 0 : index
    %201 = vector.load %arg14[%c5, %c0_51, %c0_52] : memref<8x2x32xf32, #tpu.memory_space<vmem>>, vector<1x2x32xf32>
    %202 = vector.shape_cast %201 : vector<1x2x32xf32> to vector<2x32xf32>
    %203 = vector.shape_cast %200 : vector<2x32xf32> to vector<1x2x32xf32>
    tpu.vector_store %arg14[%c5, %c0_51, %c0_52], %203 {strides = array<i32>} : memref<8x2x32xf32, #tpu.memory_space<vmem>>, vector<1x2x32xf32>,
    %204 = vector.extract_strided_slice %12 {offsets = [12, 0], sizes = [2, 128], strides = [1, 1]} : vector<16x128xf32> to vector<2x128xf32>
    %cst_53 = arith.constant dense<0.000000e+00> : vector<2x128xf32>
    %205 = tpu.matmul %200, %13, %cst_53 {dimension_numbers = #tpu.dot_dimension_numbers<[1], [0], [0], [1], [0, 0, 1, 1], [], []>} : vector<2x32xf32>, vector<32x128xf32>, vector<2x128xf32> -> vector<2x128xf32>
    %206 = arith.addf %204, %205 : vector<2x128xf32>
    %207 = vector.extract_strided_slice %206 {offsets = [0, 0], sizes = [2, 32], strides = [1, 1]} : vector<2x128xf32> to vector<2x32xf32>
    %208 = arith.negf %207 : vector<2x32xf32>
    %209 = math.exp %208 : vector<2x32xf32>
    %cst_54 = arith.constant 1.000000e+00 : f32
    %210 = vector.broadcast %cst_54 : f32 to vector<2x32xf32>
    %211 = arith.addf %210, %209 : vector<2x32xf32>
    %212 = arith.divf %210, %211 : vector<2x32xf32>
    %213 = vector.extract_strided_slice %206 {offsets = [0, 32], sizes = [2, 32], strides = [1, 1]} : vector<2x128xf32> to vector<2x32xf32>
    %214 = arith.negf %213 : vector<2x32xf32>
    %215 = math.exp %214 : vector<2x32xf32>
    %cst_55 = arith.constant 1.000000e+00 : f32
    %216 = vector.broadcast %cst_55 : f32 to vector<2x32xf32>
    %217 = arith.addf %216, %215 : vector<2x32xf32>
    %218 = arith.divf %216, %217 : vector<2x32xf32>
    %219 = vector.extract_strided_slice %206 {offsets = [0, 64], sizes = [2, 32], strides = [1, 1]} : vector<2x128xf32> to vector<2x32xf32>
    %220 = math.tanh %219 : vector<2x32xf32>
    %221 = vector.extract_strided_slice %206 {offsets = [0, 96], sizes = [2, 32], strides = [1, 1]} : vector<2x128xf32> to vector<2x32xf32>
    %222 = arith.negf %221 : vector<2x32xf32>
    %223 = math.exp %222 : vector<2x32xf32>
    %cst_56 = arith.constant 1.000000e+00 : f32
    %224 = vector.broadcast %cst_56 : f32 to vector<2x32xf32>
    %225 = arith.addf %224, %223 : vector<2x32xf32>
    %226 = arith.divf %224, %225 : vector<2x32xf32>
    %227 = arith.mulf %218, %198 : vector<2x32xf32>
    %228 = arith.mulf %212, %220 : vector<2x32xf32>
    %229 = arith.addf %227, %228 : vector<2x32xf32>
    %230 = math.tanh %229 : vector<2x32xf32>
    %231 = arith.mulf %226, %230 : vector<2x32xf32>
    %c6 = arith.constant 6 : index
    %c0_57 = arith.constant 0 : index
    %c0_58 = arith.constant 0 : index
    %232 = vector.load %arg14[%c6, %c0_57, %c0_58] : memref<8x2x32xf32, #tpu.memory_space<vmem>>, vector<1x2x32xf32>
    %233 = vector.shape_cast %232 : vector<1x2x32xf32> to vector<2x32xf32>
    %234 = vector.shape_cast %231 : vector<2x32xf32> to vector<1x2x32xf32>
    tpu.vector_store %arg14[%c6, %c0_57, %c0_58], %234 {strides = array<i32>} : memref<8x2x32xf32, #tpu.memory_space<vmem>>, vector<1x2x32xf32>,
    %235 = vector.extract_strided_slice %12 {offsets = [14, 0], sizes = [2, 128], strides = [1, 1]} : vector<16x128xf32> to vector<2x128xf32>
    %cst_59 = arith.constant dense<0.000000e+00> : vector<2x128xf32>
    %236 = tpu.matmul %231, %13, %cst_59 {dimension_numbers = #tpu.dot_dimension_numbers<[1], [0], [0], [1], [0, 0, 1, 1], [], []>} : vector<2x32xf32>, vector<32x128xf32>, vector<2x128xf32> -> vector<2x128xf32>
    %237 = arith.addf %235, %236 : vector<2x128xf32>
    %238 = vector.extract_strided_slice %237 {offsets = [0, 0], sizes = [2, 32], strides = [1, 1]} : vector<2x128xf32> to vector<2x32xf32>
    %239 = arith.negf %238 : vector<2x32xf32>
    %240 = math.exp %239 : vector<2x32xf32>
    %cst_60 = arith.constant 1.000000e+00 : f32
    %241 = vector.broadcast %cst_60 : f32 to vector<2x32xf32>
    %242 = arith.addf %241, %240 : vector<2x32xf32>
    %243 = arith.divf %241, %242 : vector<2x32xf32>
    %244 = vector.extract_strided_slice %237 {offsets = [0, 32], sizes = [2, 32], strides = [1, 1]} : vector<2x128xf32> to vector<2x32xf32>
    %245 = arith.negf %244 : vector<2x32xf32>
    %246 = math.exp %245 : vector<2x32xf32>
    %cst_61 = arith.constant 1.000000e+00 : f32
    %247 = vector.broadcast %cst_61 : f32 to vector<2x32xf32>
    %248 = arith.addf %247, %246 : vector<2x32xf32>
    %249 = arith.divf %247, %248 : vector<2x32xf32>
    %250 = vector.extract_strided_slice %237 {offsets = [0, 64], sizes = [2, 32], strides = [1, 1]} : vector<2x128xf32> to vector<2x32xf32>
    %251 = math.tanh %250 : vector<2x32xf32>
    %252 = vector.extract_strided_slice %237 {offsets = [0, 96], sizes = [2, 32], strides = [1, 1]} : vector<2x128xf32> to vector<2x32xf32>
    %253 = arith.negf %252 : vector<2x32xf32>
    %254 = math.exp %253 : vector<2x32xf32>
    %cst_62 = arith.constant 1.000000e+00 : f32
    %255 = vector.broadcast %cst_62 : f32 to vector<2x32xf32>
    %256 = arith.addf %255, %254 : vector<2x32xf32>
    %257 = arith.divf %255, %256 : vector<2x32xf32>
    %258 = arith.mulf %249, %229 : vector<2x32xf32>
    %259 = arith.mulf %243, %251 : vector<2x32xf32>
    %260 = arith.addf %258, %259 : vector<2x32xf32>
    %261 = math.tanh %260 : vector<2x32xf32>
    %262 = arith.mulf %257, %261 : vector<2x32xf32>
    %c7 = arith.constant 7 : index
    %c0_63 = arith.constant 0 : index
    %c0_64 = arith.constant 0 : index
    %263 = vector.load %arg14[%c7, %c0_63, %c0_64] : memref<8x2x32xf32, #tpu.memory_space<vmem>>, vector<1x2x32xf32>
    %264 = vector.shape_cast %263 : vector<1x2x32xf32> to vector<2x32xf32>
    %265 = vector.shape_cast %262 : vector<2x32xf32> to vector<1x2x32xf32>
    tpu.vector_store %arg14[%c7, %c0_63, %c0_64], %265 {strides = array<i32>} : memref<8x2x32xf32, #tpu.memory_space<vmem>>, vector<1x2x32xf32>,
    %c0_65 = arith.constant 0 : index
    %c0_66 = arith.constant 0 : index
    %c0_67 = arith.constant 0 : index
    %266 = vector.load %arg13[%c0_65, %c0_66, %c0_67] : memref<2x2x32xf32, #tpu.memory_space<vmem>>, vector<1x2x32xf32>
    %267 = vector.shape_cast %266 : vector<1x2x32xf32> to vector<2x32xf32>
    %268 = vector.shape_cast %262 : vector<2x32xf32> to vector<1x2x32xf32>
    tpu.vector_store %arg13[%c0_65, %c0_66, %c0_67], %268 {strides = array<i32>} : memref<2x2x32xf32, #tpu.memory_space<vmem>>, vector<1x2x32xf32>,
    %c1_68 = arith.constant 1 : index
    %c0_69 = arith.constant 0 : index
    %c0_70 = arith.constant 0 : index
    %269 = vector.load %arg13[%c1_68, %c0_69, %c0_70] : memref<2x2x32xf32, #tpu.memory_space<vmem>>, vector<1x2x32xf32>
    %270 = vector.shape_cast %269 : vector<1x2x32xf32> to vector<2x32xf32>
    %271 = vector.shape_cast %260 : vector<2x32xf32> to vector<1x2x32xf32>
    tpu.vector_store %arg13[%c1_68, %c0_69, %c0_70], %271 {strides = array<i32>} : memref<2x2x32xf32, #tpu.memory_space<vmem>>, vector<1x2x32xf32>,
    %c0_71 = arith.constant 0 : index
    %c0_72 = arith.constant 0 : index
    %272 = vector.load %arg7[%c0_71, %c0_72] : memref<16x32xf32, #tpu.memory_space<vmem>>, vector<16x32xf32>
    %c0_73 = arith.constant 0 : index
    %c0_74 = arith.constant 0 : index
    %c0_75 = arith.constant 0 : index
    %273 = vector.load %arg8[%c0_73, %c0_74, %c0_75] : memref<3x32x32xf32, #tpu.memory_space<vmem>>, vector<3x32x32xf32>
    %274 = vector.extract_strided_slice %273 {offsets = [0, 0, 0], sizes = [1, 32, 32], strides = [1, 1, 1]} : vector<3x32x32xf32> to vector<1x32x32xf32>
    %275 = vector.shape_cast %274 : vector<1x32x32xf32> to vector<32x32xf32>
    %276 = vector.extract_strided_slice %273 {offsets = [1, 0, 0], sizes = [1, 32, 32], strides = [1, 1, 1]} : vector<3x32x32xf32> to vector<1x32x32xf32>
    %277 = vector.shape_cast %276 : vector<1x32x32xf32> to vector<32x32xf32>
    %278 = vector.extract_strided_slice %273 {offsets = [2, 0, 0], sizes = [1, 32, 32], strides = [1, 1, 1]} : vector<3x32x32xf32> to vector<1x32x32xf32>
    %279 = vector.shape_cast %278 : vector<1x32x32xf32> to vector<32x32xf32>
    %c0_76 = arith.constant 0 : index
    %c0_77 = arith.constant 0 : index
    %280 = vector.load %arg9[%c0_76, %c0_77] : memref<2x32xf32, #tpu.memory_space<vmem>>, vector<2x32xf32>
    %281 = vector.extract_strided_slice %280 {offsets = [0, 0], sizes = [1, 32], strides = [1, 1]} : vector<2x32xf32> to vector<1x32xf32>
    %282 = vector.extract_strided_slice %280 {offsets = [1, 0], sizes = [1, 32], strides = [1, 1]} : vector<2x32xf32> to vector<1x32xf32>
    %cst_78 = arith.constant dense<0.000000e+00> : vector<16x32xf32>
    %283 = tpu.matmul %272, %275, %cst_78 {dimension_numbers = #tpu.dot_dimension_numbers<[1], [0], [0], [1], [0, 0, 1, 1], [], []>} : vector<16x32xf32>, vector<32x32xf32>, vector<16x32xf32> -> vector<16x32xf32>
    %284 = vector.broadcast %281 : vector<1x32xf32> to vector<16x32xf32>
    %285 = arith.addf %283, %284 : vector<16x32xf32>
    %c0_79 = arith.constant 0 : index
    %c0_80 = arith.constant 0 : index
    %c0_81 = arith.constant 0 : index
    %286 = vector.load %arg14[%c0_79, %c0_80, %c0_81] : memref<8x2x32xf32, #tpu.memory_space<vmem>>, vector<8x2x32xf32>
    %287 = vector.extract_strided_slice %286 {offsets = [0, 0, 0], sizes = [8, 1, 32], strides = [1, 1, 1]} : vector<8x2x32xf32> to vector<8x1x32xf32>
    %288 = vector.shape_cast %287 : vector<8x1x32xf32> to vector<8x32xf32>
    %289 = vector.extract_strided_slice %272 {offsets = [0, 0], sizes = [8, 32], strides = [1, 1]} : vector<16x32xf32> to vector<8x32xf32>
    %290 = vector.extract_strided_slice %285 {offsets = [0, 0], sizes = [8, 32], strides = [1, 1]} : vector<16x32xf32> to vector<8x32xf32>
    %cst_82 = arith.constant dense<0.000000e+00> : vector<8x8xf32>
    %291 = tpu.matmul %288, %290, %cst_82 {dimension_numbers = #tpu.dot_dimension_numbers<[1], [1], [0], [0], [0, 0, 1, 0], [], []>} : vector<8x32xf32>, vector<8x32xf32>, vector<8x8xf32> -> vector<8x8xf32>
    %cst_83 = arith.constant dense<0xFF800000> : vector<8xf32>
    %292 = vector.multi_reduction <maximumf>, %291, %cst_83 [1] : vector<8x8xf32> to vector<8xf32>
    %293 = vector.shape_cast %292 : vector<8xf32> to vector<8x1xf32>
    %294 = vector.broadcast %293 : vector<8x1xf32> to vector<8x8xf32>
    %295 = arith.subf %291, %294 : vector<8x8xf32>
    %296 = math.exp %295 : vector<8x8xf32>
    %cst_84 = arith.constant dense<0.000000e+00> : vector<8xf32>
    %297 = vector.multi_reduction <add>, %296, %cst_84 [1] : vector<8x8xf32> to vector<8xf32>
    %298 = vector.shape_cast %297 : vector<8xf32> to vector<8x1xf32>
    %299 = tpu.reciprocal %298 {approx = true} : vector<8x1xf32> -> vector<8x1xf32>
    %300 = vector.broadcast %299 : vector<8x1xf32> to vector<8x8xf32>
    %301 = arith.mulf %296, %300 : vector<8x8xf32>
    %cst_85 = arith.constant dense<0.000000e+00> : vector<8x32xf32>
    %302 = tpu.matmul %301, %289, %cst_85 {dimension_numbers = #tpu.dot_dimension_numbers<[1], [0], [0], [1], [0, 0, 1, 1], [], []>} : vector<8x8xf32>, vector<8x32xf32>, vector<8x32xf32> -> vector<8x32xf32>
    %303 = vector.extract_strided_slice %286 {offsets = [0, 1, 0], sizes = [8, 1, 32], strides = [1, 1, 1]} : vector<8x2x32xf32> to vector<8x1x32xf32>
    %304 = vector.shape_cast %303 : vector<8x1x32xf32> to vector<8x32xf32>
    %305 = vector.extract_strided_slice %272 {offsets = [8, 0], sizes = [8, 32], strides = [1, 1]} : vector<16x32xf32> to vector<8x32xf32>
    %306 = vector.extract_strided_slice %285 {offsets = [8, 0], sizes = [8, 32], strides = [1, 1]} : vector<16x32xf32> to vector<8x32xf32>
    %cst_86 = arith.constant dense<0.000000e+00> : vector<8x8xf32>
    %307 = tpu.matmul %304, %306, %cst_86 {dimension_numbers = #tpu.dot_dimension_numbers<[1], [1], [0], [0], [0, 0, 1, 0], [], []>} : vector<8x32xf32>, vector<8x32xf32>, vector<8x8xf32> -> vector<8x8xf32>
    %cst_87 = arith.constant dense<0xFF800000> : vector<8xf32>
    %308 = vector.multi_reduction <maximumf>, %307, %cst_87 [1] : vector<8x8xf32> to vector<8xf32>
    %309 = vector.shape_cast %308 : vector<8xf32> to vector<8x1xf32>
    %310 = vector.broadcast %309 : vector<8x1xf32> to vector<8x8xf32>
    %311 = arith.subf %307, %310 : vector<8x8xf32>
    %312 = math.exp %311 : vector<8x8xf32>
    %cst_88 = arith.constant dense<0.000000e+00> : vector<8xf32>
    %313 = vector.multi_reduction <add>, %312, %cst_88 [1] : vector<8x8xf32> to vector<8xf32>
    %314 = vector.shape_cast %313 : vector<8xf32> to vector<8x1xf32>
    %315 = tpu.reciprocal %314 {approx = true} : vector<8x1xf32> -> vector<8x1xf32>
    %316 = vector.broadcast %315 : vector<8x1xf32> to vector<8x8xf32>
    %317 = arith.mulf %312, %316 : vector<8x8xf32>
    %cst_89 = arith.constant dense<0.000000e+00> : vector<8x32xf32>
    %318 = tpu.matmul %317, %305, %cst_89 {dimension_numbers = #tpu.dot_dimension_numbers<[1], [0], [0], [1], [0, 0, 1, 1], [], []>} : vector<8x8xf32>, vector<8x32xf32>, vector<8x32xf32> -> vector<8x32xf32>
    %319 = tpu.concatenate %302, %318 in 0 : vector<8x32xf32>, vector<8x32xf32> -> vector<16x32xf32>
    %320 = tpu.concatenate %288, %304 in 0 : vector<8x32xf32>, vector<8x32xf32> -> vector<16x32xf32>
    %cst_90 = arith.constant dense<0.000000e+00> : vector<16x32xf32>
    %321 = tpu.matmul %319, %277, %cst_90 {dimension_numbers = #tpu.dot_dimension_numbers<[1], [0], [0], [1], [0, 0, 1, 1], [], []>} : vector<16x32xf32>, vector<32x32xf32>, vector<16x32xf32> -> vector<16x32xf32>
    %cst_91 = arith.constant dense<0.000000e+00> : vector<16x32xf32>
    %322 = tpu.matmul %320, %279, %cst_91 {dimension_numbers = #tpu.dot_dimension_numbers<[1], [0], [0], [1], [0, 0, 1, 1], [], []>} : vector<16x32xf32>, vector<32x32xf32>, vector<16x32xf32> -> vector<16x32xf32>
    %323 = arith.addf %321, %322 : vector<16x32xf32>
    %324 = vector.broadcast %282 : vector<1x32xf32> to vector<16x32xf32>
    %325 = arith.addf %323, %324 : vector<16x32xf32>
    %326 = math.tanh %325 : vector<16x32xf32>
    %c0_92 = arith.constant 0 : index
    %c0_93 = arith.constant 0 : index
    %327 = vector.load %arg10[%c0_92, %c0_93] : memref<32x64xf32, #tpu.memory_space<vmem>>, vector<32x64xf32>
    %cst_94 = arith.constant dense<0.000000e+00> : vector<16x64xf32>
    %328 = tpu.matmul %326, %327, %cst_94 {dimension_numbers = #tpu.dot_dimension_numbers<[1], [0], [0], [1], [0, 0, 1, 1], [], []>} : vector<16x32xf32>, vector<32x64xf32>, vector<16x64xf32> -> vector<16x64xf32>
    %c0_95 = arith.constant 0 : index
    %c0_96 = arith.constant 0 : index
    %329 = vector.load %arg11[%c0_95, %c0_96] : memref<1x64xf32, #tpu.memory_space<vmem>>, vector<1x64xf32>
    %330 = vector.broadcast %329 : vector<1x64xf32> to vector<16x64xf32>
    %331 = arith.addf %328, %330 : vector<16x64xf32>
    %cst_97 = arith.constant dense<0xFF800000> : vector<16xf32>
    %332 = vector.multi_reduction <maximumf>, %331, %cst_97 [1] : vector<16x64xf32> to vector<16xf32>
    %333 = vector.shape_cast %332 : vector<16xf32> to vector<16x1xf32>
    %334 = vector.broadcast %333 : vector<16x1xf32> to vector<16x64xf32>
    %335 = arith.subf %331, %334 : vector<16x64xf32>
    %336 = math.exp %335 : vector<16x64xf32>
    %cst_98 = arith.constant dense<0.000000e+00> : vector<16xf32>
    %337 = vector.multi_reduction <add>, %336, %cst_98 [1] : vector<16x64xf32> to vector<16xf32>
    %338 = vector.shape_cast %337 : vector<16xf32> to vector<16x1xf32>
    %339 = tpu.reciprocal %338 {approx = true} : vector<16x1xf32> -> vector<16x1xf32>
    %340 = vector.broadcast %339 : vector<16x1xf32> to vector<16x64xf32>
    %341 = arith.mulf %336, %340 : vector<16x64xf32>
    %342 = vector.extract_strided_slice %341 {offsets = [0, 0], sizes = [8, 64], strides = [1, 1]} : vector<16x64xf32> to vector<8x64xf32>
    %343 = vector.extract_strided_slice %341 {offsets = [8, 0], sizes = [8, 64], strides = [1, 1]} : vector<16x64xf32> to vector<8x64xf32>
    %344 = tpu.concatenate %342, %343 in 1 : vector<8x64xf32>, vector<8x64xf32> -> vector<8x128xf32>
    %c0_99 = arith.constant 0 : index
    %c0_100 = arith.constant 0 : index
    %345 = vector.load %arg12[%c0_99, %c0_100] : memref<8x128xf32, #tpu.memory_space<vmem>>, vector<8x128xf32>
    tpu.vector_store %arg12[%c0_99, %c0_100], %344 {strides = array<i32>} : memref<8x128xf32, #tpu.memory_space<vmem>>, vector<8x128xf32>,
    return
  }
  func.func @transform_0(%arg0: i32) -> (i32, i32) {
    %c0_i32 = arith.constant 0 : i32
    %c0_i32_0 = arith.constant 0 : i32
    %c0_i32_1 = arith.constant 0 : i32
    return %c0_i32, %c0_i32_0 : i32, i32
  }
  func.func @transform_1(%arg0: i32) -> (i32, i32) {
    %c0_i32 = arith.constant 0 : i32
    %c0_i32_0 = arith.constant 0 : i32
    %c0_i32_1 = arith.constant 0 : i32
    return %c0_i32, %c0_i32_0 : i32, i32
  }
  func.func @transform_2(%arg0: i32) -> (i32, i32) {
    %c0_i32 = arith.constant 0 : i32
    %c0_i32_0 = arith.constant 0 : i32
    %c0_i32_1 = arith.constant 0 : i32
    return %c0_i32, %c0_i32_0 : i32, i32
  }
  func.func @transform_3(%arg0: i32) -> (i32, i32) {
    %c0_i32 = arith.constant 0 : i32
    %c0_i32_0 = arith.constant 0 : i32
    %c0_i32_1 = arith.constant 0 : i32
    return %c0_i32, %c0_i32_0 : i32, i32
  }
  func.func @transform_4(%arg0: i32) -> (i32, i32) {
    %c0_i32 = arith.constant 0 : i32
    %c0_i32_0 = arith.constant 0 : i32
    %c0_i32_1 = arith.constant 0 : i32
    return %c0_i32, %c0_i32_0 : i32, i32
  }
  func.func @transform_5(%arg0: i32) -> (i32, i32, i32) {
    %c0_i32 = arith.constant 0 : i32
    %c0_i32_0 = arith.constant 0 : i32
    %c0_i32_1 = arith.constant 0 : i32
    %c0_i32_2 = arith.constant 0 : i32
    return %c0_i32, %c0_i32_0, %c0_i32_1 : i32, i32, i32
  }
  func.func @transform_6(%arg0: i32) -> (i32, i32) {
    %c0_i32 = arith.constant 0 : i32
    %c0_i32_0 = arith.constant 0 : i32
    %c0_i32_1 = arith.constant 0 : i32
    return %c0_i32, %c0_i32_0 : i32, i32
  }
  func.func @transform_7(%arg0: i32) -> (i32, i32, i32) {
    %c0_i32 = arith.constant 0 : i32
    %c0_i32_0 = arith.constant 0 : i32
    %c0_i32_1 = arith.constant 0 : i32
    %c0_i32_2 = arith.constant 0 : i32
    return %c0_i32, %c0_i32_0, %c0_i32_1 : i32, i32, i32
  }
  func.func @transform_8(%arg0: i32) -> (i32, i32) {
    %c0_i32 = arith.constant 0 : i32
    %c0_i32_0 = arith.constant 0 : i32
    %c0_i32_1 = arith.constant 0 : i32
    return %c0_i32, %c0_i32_0 : i32, i32
  }
  func.func @transform_9(%arg0: i32) -> (i32, i32) {
    %c0_i32 = arith.constant 0 : i32
    %c0_i32_0 = arith.constant 0 : i32
    %c0_i32_1 = arith.constant 0 : i32
    return %c0_i32, %c0_i32_0 : i32, i32
  }
  func.func @transform_10(%arg0: i32) -> (i32, i32) {
    %c0_i32 = arith.constant 0 : i32
    %c0_i32_0 = arith.constant 0 : i32
    %c0_i32_1 = arith.constant 0 : i32
    return %c0_i32, %c0_i32_0 : i32, i32
  }
  func.func @transform_11(%arg0: i32) -> (i32, i32) {
    %c0_i32 = arith.constant 0 : i32
    %c0_i32_0 = arith.constant 0 : i32
    %c0_i32_1 = arith.constant 0 : i32
    return %c0_i32, %c0_i32_0 : i32, i32
  }
  func.func @transform_12(%arg0: i32) -> (i32, i32, i32) {
    %c0_i32 = arith.constant 0 : i32
    %c0_i32_0 = arith.constant 0 : i32
    %c0_i32_1 = arith.constant 0 : i32
    %c0_i32_2 = arith.constant 0 : i32
    return %c0_i32, %c0_i32_0, %c0_i32_1 : i32, i32, i32
  }
}

</mosaic_0001>

<llo_original>
// kernel: decoder_forward.1
$region0: #{decoder_forward.1}
  #allocation0 [shape = 'u32[]', space=smem, size = 0x4, offset = 0x4, fixed_abs, tag = 'smem constant byte address 0x4 - core index']
  #allocation1 [shape = 'u32[144,128]{1,0:T(1,128)}', space=vmem, size = 0x12000, scoped, tag = 'internal scratch']
  #allocation2 [shape = 'f32[8,2,32]{2,1,0:T(2,128)}', space=vmem, size = 0x2000, scoped, tag = 'scratch operand']
  %s0 = inlined_call_operand.vmem [shape: s32[16,1], index: 0, kind: input, shape index: {}]
  %s1 = inlined_call_operand.hbm [shape: f32[64,32], index: 1, kind: input, shape index: {}]
  %s2 = inlined_call_operand.hbm [shape: f32[32,128], index: 2, kind: input, shape index: {}]
  %s3 = inlined_call_operand.hbm [shape: f32[32,128], index: 3, kind: input, shape index: {}]
  %s4 = inlined_call_operand.vmem [shape: f32[1,128], index: 4, kind: input, shape index: {}]
  %s5 = inlined_call_operand.vmem [shape: f32[2,2,32], index: 5, kind: input, shape index: {}]
  %s6 = inlined_call_operand.vmem [shape: f32[16,32], index: 6, kind: input, shape index: {}]
  %s7 = inlined_call_operand.vmem [shape: f32[3,32,32], index: 7, kind: input, shape index: {}]
  %s8 = inlined_call_operand.vmem [shape: f32[2,32], index: 8, kind: input, shape index: {}]
  %s9 = inlined_call_operand.hbm [shape: f32[32,64], index: 9, kind: input, shape index: {}]
  %s10 = inlined_call_operand.vmem [shape: f32[1,64], index: 10, kind: input, shape index: {}]
  %s11 = inlined_call_operand.vmem [shape: f32[8,128], index: 11, kind: output, shape index: {0}]
  %s12 = inlined_call_operand.vmem [shape: f32[2,2,32], index: 12, kind: output, shape index: {1}]
  %13 = xla_tuple %s11, %s12
  %s14 = sld [smem:[#allocation0]]
  $region78: #{decoder_forward.1} parent=0
    _
  %s16 = ssub.s32 1, %s14
  %s17 = scalar_select 0, %s16, %s14
  $region1: #{decoder_forward.1} parent=0
    #allocation3 [shape = 'u8[32768]{0}', space=vmem, size = 0x8000, scoped, tag = 'input window, operand 1, single buffered']
    #allocation4 [shape = 's32[1]{0}', space=sflag, size = 0x4, scoped, tag = 'scoped memory for decoder_forward.1']
    #allocation5 [shape = 'u8[16384]{0}', space=vmem, size = 0x4000, scoped, tag = 'input window, operand 2, single buffered']
    #allocation6 [shape = 's32[1]{0}', space=sflag, size = 0x4, scoped, tag = 'scoped memory for decoder_forward.1']
    #allocation7 [shape = 'u8[16384]{0}', space=vmem, size = 0x4000, scoped, tag = 'input window, operand 3, single buffered']
    #allocation8 [shape = 'u8[16384]{0}', space=vmem, size = 0x4000, scoped, tag = 'input window, operand 9, single buffered']
    #allocation9 [shape = 's32[1]{0}', space=sflag, size = 0x4, scoped, tag = 'scoped memory for decoder_forward.1']
    %18 = vsyncpa [#allocation4], 0
    %19 = vsyncpa [#allocation6], 0
    %20 = vsyncpa [#allocation9], 0
    // Predicated region
    $region2: #{decoder_forward.1} parent=1 // pred_check
      _
    $region3: #{decoder_forward.1} parent=1 // pred_check_branch
      %22 = sbr.rel (0) target = $region5
    $region4: #{decoder_forward.1} parent=1 // pred_region
      _
    $region5: #{decoder_forward.1} parent=1 // pred_fallthru
      _
    // Predicated region
    $region6: #{decoder_forward.1} parent=1 // pred_check
      _
    $region7: #{decoder_forward.1} parent=1 // pred_check_branch
      %24 = sbr.rel (0) target = $region9
    $region8: #{decoder_forward.1} parent=1 // pred_region
      %s26 = ssub.s32 1024, 1024
      %27 = vsyncadd [#allocation4], %s26
      %s28 = sshll.u32 [#allocation3], 4
      %s29 = int_to_ptr.vmem [resolvable:$true] %s28
      %34 = dma.hbm_to_vmem [thread:$0]  %s1, 1024, %s29, [#allocation4], 128, 128, 8
    $region9: #{decoder_forward.1} parent=1 // pred_fallthru
      _
    // Predicated region
    $region10: #{decoder_forward.1} parent=1 // pred_check
      _
    $region11: #{decoder_forward.1} parent=1 // pred_check_branch
      %36 = sbr.rel (0) target = $region13
    $region12: #{decoder_forward.1} parent=1 // pred_region
      %s38 = ssub.s32 512, 512
      %39 = vsyncadd [#allocation6], %s38
      %s40 = sshll.u32 [#allocation5], 4
      %s41 = int_to_ptr.vmem [resolvable:$true] %s40
      %46 = dma.hbm_to_vmem [thread:$0]  %s2, 512, %s41, [#allocation6], 128, 128, 8
    $region13: #{decoder_forward.1} parent=1 // pred_fallthru
      _
    // Predicated region
    $region14: #{decoder_forward.1} parent=1 // pred_check
      _
    $region15: #{decoder_forward.1} parent=1 // pred_check_branch
      %48 = sbr.rel (0) target = $region17
    $region16: #{decoder_forward.1} parent=1 // pred_region
      %s50 = ssub.s32 512, 512
      %51 = vsyncadd [#allocation6], %s50
      %s52 = sshll.u32 [#allocation7], 4
      %s53 = int_to_ptr.vmem [resolvable:$true] %s52
      %58 = dma.hbm_to_vmem [thread:$0]  %s3, 512, %s53, [#allocation6], 128, 128, 8
    $region17: #{decoder_forward.1} parent=1 // pred_fallthru
      _
    // Predicated region
    $region18: #{decoder_forward.1} parent=1 // pred_check
      _
    $region19: #{decoder_forward.1} parent=1 // pred_check_branch
      %60 = sbr.rel (0) target = $region21
    $region20: #{decoder_forward.1} parent=1 // pred_region
      _
    $region21: #{decoder_forward.1} parent=1 // pred_fallthru
      _
    // Predicated region
    $region22: #{decoder_forward.1} parent=1 // pred_check
      _
    $region23: #{decoder_forward.1} parent=1 // pred_check_branch
      %62 = sbr.rel (0) target = $region25
    $region24: #{decoder_forward.1} parent=1 // pred_region
      _
    $region25: #{decoder_forward.1} parent=1 // pred_fallthru
      _
    // Predicated region
    $region26: #{decoder_forward.1} parent=1 // pred_check
      _
    $region27: #{decoder_forward.1} parent=1 // pred_check_branch
      %64 = sbr.rel (0) target = $region29
    $region28: #{decoder_forward.1} parent=1 // pred_region
      _
    $region29: #{decoder_forward.1} parent=1 // pred_fallthru
      _
    // Predicated region
    $region30: #{decoder_forward.1} parent=1 // pred_check
      _
    $region31: #{decoder_forward.1} parent=1 // pred_check_branch
      %66 = sbr.rel (0) target = $region33
    $region32: #{decoder_forward.1} parent=1 // pred_region
      _
    $region33: #{decoder_forward.1} parent=1 // pred_fallthru
      _
    // Predicated region
    $region34: #{decoder_forward.1} parent=1 // pred_check
      _
    $region35: #{decoder_forward.1} parent=1 // pred_check_branch
      %68 = sbr.rel (0) target = $region37
    $region36: #{decoder_forward.1} parent=1 // pred_region
      _
    $region37: #{decoder_forward.1} parent=1 // pred_fallthru
      _
    // Predicated region
    $region38: #{decoder_forward.1} parent=1 // pred_check
      _
    $region39: #{decoder_forward.1} parent=1 // pred_check_branch
      %70 = sbr.rel (0) target = $region41
    $region40: #{decoder_forward.1} parent=1 // pred_region
      %s72 = ssub.s32 512, 512
      %73 = vsyncadd [#allocation9], %s72
      %s74 = sshll.u32 [#allocation8], 4
      %s75 = int_to_ptr.vmem [resolvable:$true] %s74
      %80 = dma.hbm_to_vmem [thread:$0]  %s9, 512, %s75, [#allocation9], 128, 128, 8
    $region41: #{decoder_forward.1} parent=1 // pred_fallthru
      _
    // Predicated region
    $region42: #{decoder_forward.1} parent=1 // pred_check
      _
    $region43: #{decoder_forward.1} parent=1 // pred_check_branch
      %82 = sbr.rel (0) target = $region45
    $region44: #{decoder_forward.1} parent=1 // pred_region
      _
    $region45: #{decoder_forward.1} parent=1 // pred_fallthru
      _
    // Predicated region
    $region46: #{decoder_forward.1} parent=1 // pred_check
      _
    $region47: #{decoder_forward.1} parent=1 // pred_check_branch
      %84 = sbr.rel (0) target = $region49
    $region48: #{decoder_forward.1} parent=1 // pred_region
      %85 = dma.done [#allocation4], 1024
    $region49: #{decoder_forward.1} parent=1 // pred_fallthru
      _
    // Predicated region
    $region50: #{decoder_forward.1} parent=1 // pred_check
      _
    $region51: #{decoder_forward.1} parent=1 // pred_check_branch
      %87 = sbr.rel (0) target = $region53
    $region52: #{decoder_forward.1} parent=1 // pred_region
      %88 = dma.done [#allocation6], 512
    $region53: #{decoder_forward.1} parent=1 // pred_fallthru
      _
    // Predicated region
    $region54: #{decoder_forward.1} parent=1 // pred_check
      _
    $region55: #{decoder_forward.1} parent=1 // pred_check_branch
      %90 = sbr.rel (0) target = $region57
    $region56: #{decoder_forward.1} parent=1 // pred_region
      %91 = dma.done [#allocation6], 512
    $region57: #{decoder_forward.1} parent=1 // pred_fallthru
      _
    // Predicated region
    $region58: #{decoder_forward.1} parent=1 // pred_check
      _
    $region59: #{decoder_forward.1} parent=1 // pred_check_branch
      %93 = sbr.rel (0) target = $region61
    $region60: #{decoder_forward.1} parent=1 // pred_region
      %94 = dma.done [#allocation9], 512
    $region61: #{decoder_forward.1} parent=1 // pred_fallthru
      _
    %v95 = vld [vmem:[%s0] sm:$0xff]
    %v96 = vld [vmem:[%s0 + $0x8] sm:$0xff]
    %v97 = vlaneseq
    %v98 = vand.u32 %v97, 127
    %99 = vset.pattern.permute.xlu0 0
    %100 = vperm.xlu0 %99, %v95
    %v101 = vpop.permute.xlu0 %100
    %102 = vset.pattern.permute.xlu0 0
    %103 = vperm.xlu0 %102, %v96
    %v104 = vpop.permute.xlu0 %103
    %vm105 = vcmp.eq.s32.totalorder %v98, %v101
    %vm106 = vcmp.eq.s32.totalorder %v98, %v104
    %v107 = vsel %vm105, 1, 0
    %v108 = vsel %vm106, 1, 0
    %v109 = vcvt.s32.f32 %v107
    %v110 = vcvt.s32.f32 %v108
    %v111 = vld [vmem:[#allocation3] sm:$0xff]
    %v112 = vld [vmem:[#allocation3 + $0x8] sm:$0xff]
    %v113 = vld [vmem:[#allocation3 + $0x10] sm:$0xff]
    %v114 = vld [vmem:[#allocation3 + $0x18] sm:$0xff]
    %v115 = vld [vmem:[#allocation3 + $0x20] sm:$0xff]
    %v116 = vld [vmem:[#allocation3 + $0x28] sm:$0xff]
    %v117 = vld [vmem:[#allocation3 + $0x30] sm:$0xff]
    %v118 = vld [vmem:[#allocation3 + $0x38] sm:$0xff]
    %vm119 = vcmask 523264
    %v121 = vsel %vm119, %v109, 0
    %v124 = vsel %vm119, %v110, 0
    %126 = vmatprep.subr.mxu0 0.0
    %127 = vmatpush1.msra.mxu0 %v111
    %128 = vmatprep.subr.mxu0 0.0
    %129 = vmatpush1.msra.mxu0 %v112
    %130 = vmatprep.subr.mxu0 0.0
    %131 = vmatpush1.msra.mxu0 %v113
    %132 = vmatprep.subr.mxu0 0.0
    %133 = vmatpush1.msra.mxu0 %v114
    %134 = vmatprep.subr.mxu0 0.0
    %135 = vmatpush1.msra.mxu0 %v115
    %136 = vmatprep.subr.mxu0 0.0
    %137 = vmatpush1.msra.mxu0 %v116
    %138 = vmatprep.subr.mxu0 0.0
    %139 = vmatpush1.msra.mxu0 %v117
    %140 = vmatprep.subr.mxu0 0.0
    %141 = vmatpush1.msra.mxu0 %v118
    %142 = vmatprep.subr.mxu0 0.0
    %143 = vmatpush1.msra.mxu0 0.0
    %144 = vmatprep.subr.mxu0 0.0
    %145 = vmatpush1.msra.mxu0 0.0
    %146 = vmatprep.subr.mxu0 0.0
    %147 = vmatpush1.msra.mxu0 0.0
    %148 = vmatprep.subr.mxu0 0.0
    %149 = vmatpush1.msra.mxu0 0.0
    %150 = vmatprep.subr.mxu0 0.0
    %151 = vmatpush1.msra.mxu0 0.0
    %152 = vmatprep.subr.mxu0 0.0
    %153 = vmatpush1.msra.mxu0 0.0
    %154 = vmatprep.subr.mxu0 0.0
    %155 = vmatpush1.msra.mxu0 0.0
    %156 = vmatprep.subr.mxu0 0.0
    %157 = vmatpush1.msra.mxu0 0.0
    %158 = vmatprep.subr.mxu0 0.0
    %159 = vmatpush1.msra.mxu0 0.0
    %160 = vmatprep.subr.mxu0 0.0
    %161 = vmatpush1.msra.mxu0 0.0
    %162 = vmatprep.subr.mxu0 0.0
    %163 = vmatpush1.msra.mxu0 0.0
    %164 = vmatprep.subr.mxu0 0.0
    %165 = vmatpush1.msra.mxu0 0.0
    %166 = vmatprep.subr.mxu0 0.0
    %167 = vmatpush1.msra.mxu0 0.0
    %168 = vmatprep.subr.mxu0 0.0
    %169 = vmatpush1.msra.mxu0 0.0
    %170 = vmatprep.subr.mxu0 0.0
    %171 = vmatpush1.msra.mxu0 0.0
    %172 = vmatprep.subr.mxu0 0.0
    %173 = vmatpush1.msra.mxu0 0.0
    %174 = vmatprep.subr.mxu0 0.0
    %175 = vmatpush1.msra.mxu0 0.0
    %176 = vmatprep.subr.mxu0 0.0
    %177 = vmatpush1.msra.mxu0 0.0
    %178 = vmatprep.subr.mxu0 0.0
    %179 = vmatpush1.msra.mxu0 0.0
    %180 = vmatprep.subr.mxu0 0.0
    %181 = vmatpush1.msra.mxu0 0.0
    %182 = vmatprep.subr.mxu0 0.0
    %183 = vmatpush1.msra.mxu0 0.0
    %184 = vmatprep.subr.mxu0 0.0
    %185 = vmatpush1.msra.mxu0 0.0
    %186 = vmatprep.subr.mxu0 0.0
    %187 = vmatpush1.msra.mxu0 0.0
    %188 = vmatprep.subr.mxu0 0.0
    %189 = vmatpush1.msra.mxu0 0.0
    %190 = vmatprep.mubr.f32.mxu0 0.0
    %191 = vmatmul.mubr.f32.gmra.mrb[0].mxu0 %v121
    %v192 = vpop.f32.mrb[0].mxu0
    %v193 = vadd.f32 0.0, %v192
    %v194 = vpop.f32.mrb[0].mxu0
    %195 = vmatprep.mubr.f32.mxu0 0.0
    %196 = vmatmul.mubr.f32.gmra.mrb[0].mxu0 %v124
    %v197 = vpop.f32.mrb[0].mxu0
    %v198 = vadd.f32 0.0, %v197
    %v199 = vpop.f32.mrb[0].mxu0
    %200 = vdwg.mxu0
    %v201 = vld [vmem:[#allocation5] sm:$0xff]
    %v202 = vld [vmem:[#allocation5 + $0x8] sm:$0xff]
    %v203 = vld [vmem:[#allocation5 + $0x10] sm:$0xff]
    %v204 = vld [vmem:[#allocation5 + $0x18] sm:$0xff]
    %v205 = vld [vmem:[%s4] sm:$0x1]
    %v207 = vlaneseq
    %v208 = vshrl.u32 %v207, 7
    %v209 = vsub.s32 0, %v208
    %v210 = vrot.slane %v205, %v209
    %vm212 = vcmask 261120
    %v214 = vsel %vm212, %v193, 0
    %v217 = vsel %vm212, %v198, 0
    %219 = vmatprep.subr.mxu0 0.0
    %220 = vmatpush1.msra.mxu0 %v201
    %221 = vmatprep.subr.mxu0 0.0
    %222 = vmatpush1.msra.mxu0 %v202
    %223 = vmatprep.subr.mxu0 0.0
    %224 = vmatpush1.msra.mxu0 %v203
    %225 = vmatprep.subr.mxu0 0.0
    %226 = vmatpush1.msra.mxu0 %v204
    %227 = vmatprep.subr.mxu0 0.0
    %228 = vmatpush1.msra.mxu0 0.0
    %229 = vmatprep.subr.mxu0 0.0
    %230 = vmatpush1.msra.mxu0 0.0
    %231 = vmatprep.subr.mxu0 0.0
    %232 = vmatpush1.msra.mxu0 0.0
    %233 = vmatprep.subr.mxu0 0.0
    %234 = vmatpush1.msra.mxu0 0.0
    %235 = vmatprep.subr.mxu0 0.0
    %236 = vmatpush1.msra.mxu0 0.0
    %237 = vmatprep.subr.mxu0 0.0
    %238 = vmatpush1.msra.mxu0 0.0
    %239 = vmatprep.subr.mxu0 0.0
    %240 = vmatpush1.msra.mxu0 0.0
    %241 = vmatprep.subr.mxu0 0.0
    %242 = vmatpush1.msra.mxu0 0.0
    %243 = vmatprep.subr.mxu0 0.0
    %244 = vmatpush1.msra.mxu0 0.0
    %245 = vmatprep.subr.mxu0 0.0
    %246 = vmatpush1.msra.mxu0 0.0
    %247 = vmatprep.subr.mxu0 0.0
    %248 = vmatpush1.msra.mxu0 0.0
    %249 = vmatprep.subr.mxu0 0.0
    %250 = vmatpush1.msra.mxu0 0.0
    %251 = vmatprep.subr.mxu0 0.0
    %252 = vmatpush1.msra.mxu0 0.0
    %253 = vmatprep.subr.mxu0 0.0
    %254 = vmatpush1.msra.mxu0 0.0
    %255 = vmatprep.subr.mxu0 0.0
    %256 = vmatpush1.msra.mxu0 0.0
    %257 = vmatprep.subr.mxu0 0.0
    %258 = vmatpush1.msra.mxu0 0.0
    %259 = vmatprep.subr.mxu0 0.0
    %260 = vmatpush1.msra.mxu0 0.0
    %261 = vmatprep.subr.mxu0 0.0
    %262 = vmatpush1.msra.mxu0 0.0
    %263 = vmatprep.subr.mxu0 0.0
    %264 = vmatpush1.msra.mxu0 0.0
    %265 = vmatprep.subr.mxu0 0.0
    %266 = vmatpush1.msra.mxu0 0.0
    %267 = vmatprep.subr.mxu0 0.0
    %268 = vmatpush1.msra.mxu0 0.0
    %269 = vmatprep.subr.mxu0 0.0
    %270 = vmatpush1.msra.mxu0 0.0
    %271 = vmatprep.subr.mxu0 0.0
    %272 = vmatpush1.msra.mxu0 0.0
    %273 = vmatprep.subr.mxu0 0.0
    %274 = vmatpush1.msra.mxu0 0.0
    %275 = vmatprep.subr.mxu0 0.0
    %276 = vmatpush1.msra.mxu0 0.0
    %277 = vmatprep.subr.mxu0 0.0
    %278 = vmatpush1.msra.mxu0 0.0
    %279 = vmatprep.subr.mxu0 0.0
    %280 = vmatpush1.msra.mxu0 0.0
    %281 = vmatprep.subr.mxu0 0.0
    %282 = vmatpush1.msra.mxu0 0.0
    %283 = vmatprep.mubr.f32.mxu0 0.0
    %284 = vmatmul.mubr.f32.gmra.mrb[0].mxu0 %v214
    %v285 = vpop.f32.mrb[0].mxu0
    %v286 = vadd.f32 %v210, %v285
    %v287 = vpop.f32.mrb[0].mxu0
    %288 = vmatprep.mubr.f32.mxu0 0.0
    %289 = vmatmul.mubr.f32.gmra.mrb[0].mxu0 %v217
    %v290 = vpop.f32.mrb[0].mxu0
    %v291 = vadd.f32 %v210, %v290
    %v292 = vpop.f32.mrb[0].mxu0
    %293 = vdwg.mxu0
    %v294 = vld [vmem:[#allocation7] sm:$0xff]
    %v295 = vld [vmem:[#allocation7 + $0x8] sm:$0xff]
    %v296 = vld [vmem:[#allocation7 + $0x10] sm:$0xff]
    %v297 = vld [vmem:[#allocation7 + $0x18] sm:$0xff]
    %v298 = vld [vmem:[%s5] sm:$0x3]
    %s299 = scalar_lea.vmem %s5, 2
    %v300 = vld [vmem:[%s299] sm:$0x3]
    %v302 = vsel %vm212, %v298, 0
    %304 = vmatprep.subr.mxu0 0.0
    %305 = vmatpush1.msra.mxu0 %v294
    %306 = vmatprep.subr.mxu0 0.0
    %307 = vmatpush1.msra.mxu0 %v295
    %308 = vmatprep.subr.mxu0 0.0
    %309 = vmatpush1.msra.mxu0 %v296
    %310 = vmatprep.subr.mxu0 0.0
    %311 = vmatpush1.msra.mxu0 %v297
    %312 = vmatprep.subr.mxu0 0.0
    %313 = vmatpush1.msra.mxu0 0.0
    %314 = vmatprep.subr.mxu0 0.0
    %315 = vmatpush1.msra.mxu0 0.0
    %316 = vmatprep.subr.mxu0 0.0
    %317 = vmatpush1.msra.mxu0 0.0
    %318 = vmatprep.subr.mxu0 0.0
    %319 = vmatpush1.msra.mxu0 0.0
    %320 = vmatprep.subr.mxu0 0.0
    %321 = vmatpush1.msra.mxu0 0.0
    %322 = vmatprep.subr.mxu0 0.0
    %323 = vmatpush1.msra.mxu0 0.0
    %324 = vmatprep.subr.mxu0 0.0
    %325 = vmatpush1.msra.mxu0 0.0
    %326 = vmatprep.subr.mxu0 0.0
    %327 = vmatpush1.msra.mxu0 0.0
    %328 = vmatprep.subr.mxu0 0.0
    %329 = vmatpush1.msra.mxu0 0.0
    %330 = vmatprep.subr.mxu0 0.0
    %331 = vmatpush1.msra.mxu0 0.0
    %332 = vmatprep.subr.mxu0 0.0
    %333 = vmatpush1.msra.mxu0 0.0
    %334 = vmatprep.subr.mxu0 0.0
    %335 = vmatpush1.msra.mxu0 0.0
    %336 = vmatprep.subr.mxu0 0.0
    %337 = vmatpush1.msra.mxu0 0.0
    %338 = vmatprep.subr.mxu0 0.0
    %339 = vmatpush1.msra.mxu0 0.0
    %340 = vmatprep.subr.mxu0 0.0
    %341 = vmatpush1.msra.mxu0 0.0
    %342 = vmatprep.subr.mxu0 0.0
    %343 = vmatpush1.msra.mxu0 0.0
    %344 = vmatprep.subr.mxu0 0.0
    %345 = vmatpush1.msra.mxu0 0.0
    %346 = vmatprep.subr.mxu0 0.0
    %347 = vmatpush1.msra.mxu0 0.0
    %348 = vmatprep.subr.mxu0 0.0
    %349 = vmatpush1.msra.mxu0 0.0
    %350 = vmatprep.subr.mxu0 0.0
    %351 = vmatpush1.msra.mxu0 0.0
    %352 = vmatprep.subr.mxu0 0.0
    %353 = vmatpush1.msra.mxu0 0.0
    %354 = vmatprep.subr.mxu0 0.0
    %355 = vmatpush1.msra.mxu0 0.0
    %356 = vmatprep.subr.mxu0 0.0
    %357 = vmatpush1.msra.mxu0 0.0
    %358 = vmatprep.subr.mxu0 0.0
    %359 = vmatpush1.msra.mxu0 0.0
    %360 = vmatprep.subr.mxu0 0.0
    %361 = vmatpush1.msra.mxu0 0.0
    %362 = vmatprep.subr.mxu0 0.0
    %363 = vmatpush1.msra.mxu0 0.0
    %364 = vmatprep.subr.mxu0 0.0
    %365 = vmatpush1.msra.mxu0 0.0
    %366 = vmatprep.subr.mxu0 0.0
    %367 = vmatpush1.msra.mxu0 0.0
    %368 = vmatprep.mubr.f32.mxu0 0.0
    %369 = vmatmul.mubr.f32.gmra.mrb[0].mxu0 %v302
    %v370 = vpop.f32.mrb[0].mxu0
    %v371 = vadd.f32 0.0, %v370
    %v372 = vpop.f32.mrb[0].mxu0
    %373 = vdwg.mxu0
    %v374 = vadd.f32 %v286, %v371
    %v375 = vxor.u32 %v374, 2147483648
    %v376 = vmul.f32 %v375, 1.442695
    %v377 = vpow.pop %v376
    %v378 = vadd.f32 %v377, 1.0
    %v379 = vrcp.pop %v378
    %v380 = vmul.f32 1.0, %v379
    %v381 = vtanh.pop %v374
    %383 = vrot.lane.b32.xlu0 %v300, 32
    %v384 = vpop.permute.xlu0 %383
    %v386 = vmul.f32 %v380, %v384
    %388 = vrot.lane.b32.xlu0 %v381, 64
    %v389 = vpop.permute.xlu0 %388
    %v391 = vmul.f32 %v380, %v389
    %393 = vrot.lane.b32.xlu0 %v391, 32
    %v394 = vpop.permute.xlu0 %393
    %v396 = vadd.f32 %v386, %v394
    %v397 = vtanh.pop %v396
    %399 = vrot.lane.b32.xlu0 %v397, 64
    %v400 = vpop.permute.xlu0 %399
    %v402 = vmul.f32 %v380, %v400
    %404 = vrot.lane.b32.xlu0 %v402, 32
    %v405 = vpop.permute.xlu0 %404
    %vm407 = vcmask 254976
    %408 = vst.msk [vmem:[#allocation2] sm:$0x3] %vm407, %v405
    %v409 = vsel %vm212, %v405, 0
    %411 = vmatprep.subr.mxu0 0.0
    %412 = vmatpush1.msra.mxu0 %v294
    %413 = vmatprep.subr.mxu0 0.0
    %414 = vmatpush1.msra.mxu0 %v295
    %415 = vmatprep.subr.mxu0 0.0
    %416 = vmatpush1.msra.mxu0 %v296
    %417 = vmatprep.subr.mxu0 0.0
    %418 = vmatpush1.msra.mxu0 %v297
    %419 = vmatprep.subr.mxu0 0.0
    %420 = vmatpush1.msra.mxu0 0.0
    %421 = vmatprep.subr.mxu0 0.0
    %422 = vmatpush1.msra.mxu0 0.0
    %423 = vmatprep.subr.mxu0 0.0
    %424 = vmatpush1.msra.mxu0 0.0
    %425 = vmatprep.subr.mxu0 0.0
    %426 = vmatpush1.msra.mxu0 0.0
    %427 = vmatprep.subr.mxu0 0.0
    %428 = vmatpush1.msra.mxu0 0.0
    %429 = vmatprep.subr.mxu0 0.0
    %430 = vmatpush1.msra.mxu0 0.0
    %431 = vmatprep.subr.mxu0 0.0
    %432 = vmatpush1.msra.mxu0 0.0
    %433 = vmatprep.subr.mxu0 0.0
    %434 = vmatpush1.msra.mxu0 0.0
    %435 = vmatprep.subr.mxu0 0.0
    %436 = vmatpush1.msra.mxu0 0.0
    %437 = vmatprep.subr.mxu0 0.0
    %438 = vmatpush1.msra.mxu0 0.0
    %439 = vmatprep.subr.mxu0 0.0
    %440 = vmatpush1.msra.mxu0 0.0
    %441 = vmatprep.subr.mxu0 0.0
    %442 = vmatpush1.msra.mxu0 0.0
    %443 = vmatprep.subr.mxu0 0.0
    %444 = vmatpush1.msra.mxu0 0.0
    %445 = vmatprep.subr.mxu0 0.0
    %446 = vmatpush1.msra.mxu0 0.0
    %447 = vmatprep.subr.mxu0 0.0
    %448 = vmatpush1.msra.mxu0 0.0
    %449 = vmatprep.subr.mxu0 0.0
    %450 = vmatpush1.msra.mxu0 0.0
    %451 = vmatprep.subr.mxu0 0.0
    %452 = vmatpush1.msra.mxu0 0.0
    %453 = vmatprep.subr.mxu0 0.0
    %454 = vmatpush1.msra.mxu0 0.0
    %455 = vmatprep.subr.mxu0 0.0
    %456 = vmatpush1.msra.mxu0 0.0
    %457 = vmatprep.subr.mxu0 0.0
    %458 = vmatpush1.msra.mxu0 0.0
    %459 = vmatprep.subr.mxu0 0.0
    %460 = vmatpush1.msra.mxu0 0.0
    %461 = vmatprep.subr.mxu0 0.0
    %462 = vmatpush1.msra.mxu0 0.0
    %463 = vmatprep.subr.mxu0 0.0
    %464 = vmatpush1.msra.mxu0 0.0
    %465 = vmatprep.subr.mxu0 0.0
    %466 = vmatpush1.msra.mxu0 0.0
    %467 = vmatprep.subr.mxu0 0.0
    %468 = vmatpush1.msra.mxu0 0.0
    %469 = vmatprep.subr.mxu0 0.0
    %470 = vmatpush1.msra.mxu0 0.0
    %471 = vmatprep.subr.mxu0 0.0
    %472 = vmatpush1.msra.mxu0 0.0
    %473 = vmatprep.subr.mxu0 0.0
    %474 = vmatpush1.msra.mxu0 0.0
    %475 = vmatprep.mubr.f32.mxu0 0.0
    %476 = vmatmul.mubr.f32.gmra.mrb[0].mxu0 %v409
    %v477 = vpop.f32.mrb[0].mxu0
    %v478 = vadd.f32 0.0, %v477
    %v479 = vpop.f32.mrb[0].mxu0
    %480 = vdwg.mxu0
    %v482 = vrot.slane %v478, 6
    %v484 = vadd.f32 %v286, %v482
    %v485 = vxor.u32 %v484, 2147483648
    %v486 = vmul.f32 %v485, 1.442695
    %v487 = vpow.pop %v486
    %v488 = vadd.f32 %v487, 1.0
    %v489 = vrcp.pop %v488
    %v490 = vmul.f32 1.0, %v489
    %v491 = vtanh.pop %v484
    %v493 = vrot.slane %v396, 6
    %v495 = vmul.f32 %v490, %v493
    %497 = vrot.lane.b32.xlu0 %v491, 64
    %v498 = vpop.permute.xlu0 %497
    %v500 = vmul.f32 %v490, %v498
    %502 = vrot.lane.b32.xlu0 %v500, 32
    %v503 = vpop.permute.xlu0 %502
    %v505 = vadd.f32 %v495, %v503
    %v506 = vtanh.pop %v505
    %508 = vrot.lane.b32.xlu0 %v506, 64
    %v509 = vpop.permute.xlu0 %508
    %v511 = vmul.f32 %v490, %v509
    %513 = vrot.lane.b32.xlu0 %v511, 32
    %v514 = vpop.permute.xlu0 %513
    %s516 = scalar_lea.vmem [#allocation2], 2
    %vm517 = vcmask 257026
    %518 = vst.msk [vmem:[%s516 - $0x2] sm:$0xc] %vm517, %v514
    %v519 = vrot.slane %v511, 2
    %520 = vrot.lane.b32.xlu0 %v519, 32
    %v521 = vpop.permute.xlu0 %520
    %v522 = vsel %vm212, %v521, 0
    %524 = vmatprep.subr.mxu0 0.0
    %525 = vmatpush1.msra.mxu0 %v294
    %526 = vmatprep.subr.mxu0 0.0
    %527 = vmatpush1.msra.mxu0 %v295
    %528 = vmatprep.subr.mxu0 0.0
    %529 = vmatpush1.msra.mxu0 %v296
    %530 = vmatprep.subr.mxu0 0.0
    %531 = vmatpush1.msra.mxu0 %v297
    %532 = vmatprep.subr.mxu0 0.0
    %533 = vmatpush1.msra.mxu0 0.0
    %534 = vmatprep.subr.mxu0 0.0
    %535 = vmatpush1.msra.mxu0 0.0
    %536 = vmatprep.subr.mxu0 0.0
    %537 = vmatpush1.msra.mxu0 0.0
    %538 = vmatprep.subr.mxu0 0.0
    %539 = vmatpush1.msra.mxu0 0.0
    %540 = vmatprep.subr.mxu0 0.0
    %541 = vmatpush1.msra.mxu0 0.0
    %542 = vmatprep.subr.mxu0 0.0
    %543 = vmatpush1.msra.mxu0 0.0
    %544 = vmatprep.subr.mxu0 0.0
    %545 = vmatpush1.msra.mxu0 0.0
    %546 = vmatprep.subr.mxu0 0.0
    %547 = vmatpush1.msra.mxu0 0.0
    %548 = vmatprep.subr.mxu0 0.0
    %549 = vmatpush1.msra.mxu0 0.0
    %550 = vmatprep.subr.mxu0 0.0
    %551 = vmatpush1.msra.mxu0 0.0
    %552 = vmatprep.subr.mxu0 0.0
    %553 = vmatpush1.msra.mxu0 0.0
    %554 = vmatprep.subr.mxu0 0.0
    %555 = vmatpush1.msra.mxu0 0.0
    %556 = vmatprep.subr.mxu0 0.0
    %557 = vmatpush1.msra.mxu0 0.0
    %558 = vmatprep.subr.mxu0 0.0
    %559 = vmatpush1.msra.mxu0 0.0
    %560 = vmatprep.subr.mxu0 0.0
    %561 = vmatpush1.msra.mxu0 0.0
    %562 = vmatprep.subr.mxu0 0.0
    %563 = vmatpush1.msra.mxu0 0.0
    %564 = vmatprep.subr.mxu0 0.0
    %565 = vmatpush1.msra.mxu0 0.0
    %566 = vmatprep.subr.mxu0 0.0
    %567 = vmatpush1.msra.mxu0 0.0
    %568 = vmatprep.subr.mxu0 0.0
    %569 = vmatpush1.msra.mxu0 0.0
    %570 = vmatprep.subr.mxu0 0.0
    %571 = vmatpush1.msra.mxu0 0.0
    %572 = vmatprep.subr.mxu0 0.0
    %573 = vmatpush1.msra.mxu0 0.0
    %574 = vmatprep.subr.mxu0 0.0
    %575 = vmatpush1.msra.mxu0 0.0
    %576 = vmatprep.subr.mxu0 0.0
    %577 = vmatpush1.msra.mxu0 0.0
    %578 = vmatprep.subr.mxu0 0.0
    %579 = vmatpush1.msra.mxu0 0.0
    %580 = vmatprep.subr.mxu0 0.0
    %581 = vmatpush1.msra.mxu0 0.0
    %582 = vmatprep.subr.mxu0 0.0
    %583 = vmatpush1.msra.mxu0 0.0
    %584 = vmatprep.subr.mxu0 0.0
    %585 = vmatpush1.msra.mxu0 0.0
    %586 = vmatprep.subr.mxu0 0.0
    %587 = vmatpush1.msra.mxu0 0.0
    %588 = vmatprep.mubr.f32.mxu0 0.0
    %589 = vmatmul.mubr.f32.gmra.mrb[0].mxu0 %v522
    %v590 = vpop.f32.mrb[0].mxu0
    %v591 = vadd.f32 0.0, %v590
    %v592 = vpop.f32.mrb[0].mxu0
    %593 = vdwg.mxu0
    %v595 = vrot.slane %v591, 4
    %v597 = vadd.f32 %v286, %v595
    %v598 = vxor.u32 %v597, 2147483648
    %v599 = vmul.f32 %v598, 1.442695
    %v600 = vpow.pop %v599
    %v601 = vadd.f32 %v600, 1.0
    %v602 = vrcp.pop %v601
    %v603 = vmul.f32 1.0, %v602
    %v604 = vtanh.pop %v597
    %v606 = vrot.slane %v505, 6
    %v608 = vmul.f32 %v603, %v606
    %610 = vrot.lane.b32.xlu0 %v604, 64
    %v611 = vpop.permute.xlu0 %610
    %v613 = vmul.f32 %v603, %v611
    %615 = vrot.lane.b32.xlu0 %v613, 32
    %v616 = vpop.permute.xlu0 %615
    %v618 = vadd.f32 %v608, %v616
    %v619 = vtanh.pop %v618
    %621 = vrot.lane.b32.xlu0 %v619, 64
    %v622 = vpop.permute.xlu0 %621
    %v624 = vmul.f32 %v603, %v622
    %626 = vrot.lane.b32.xlu0 %v624, 32
    %v627 = vpop.permute.xlu0 %626
    %s629 = scalar_lea.vmem [#allocation2], 4
    %vm630 = vcmask 259076
    %631 = vst.msk [vmem:[%s629 - $0x4] sm:$0x30] %vm630, %v627
    %v632 = vrot.slane %v624, 4
    %633 = vrot.lane.b32.xlu0 %v632, 32
    %v634 = vpop.permute.xlu0 %633
    %v635 = vsel %vm212, %v634, 0
    %637 = vmatprep.subr.mxu0 0.0
    %638 = vmatpush1.msra.mxu0 %v294
    %639 = vmatprep.subr.mxu0 0.0
    %640 = vmatpush1.msra.mxu0 %v295
    %641 = vmatprep.subr.mxu0 0.0
    %642 = vmatpush1.msra.mxu0 %v296
    %643 = vmatprep.subr.mxu0 0.0
    %644 = vmatpush1.msra.mxu0 %v297
    %645 = vmatprep.subr.mxu0 0.0
    %646 = vmatpush1.msra.mxu0 0.0
    %647 = vmatprep.subr.mxu0 0.0
    %648 = vmatpush1.msra.mxu0 0.0
    %649 = vmatprep.subr.mxu0 0.0
    %650 = vmatpush1.msra.mxu0 0.0
    %651 = vmatprep.subr.mxu0 0.0
    %652 = vmatpush1.msra.mxu0 0.0
    %653 = vmatprep.subr.mxu0 0.0
    %654 = vmatpush1.msra.mxu0 0.0
    %655 = vmatprep.subr.mxu0 0.0
    %656 = vmatpush1.msra.mxu0 0.0
    %657 = vmatprep.subr.mxu0 0.0
    %658 = vmatpush1.msra.mxu0 0.0
    %659 = vmatprep.subr.mxu0 0.0
    %660 = vmatpush1.msra.mxu0 0.0
    %661 = vmatprep.subr.mxu0 0.0
    %662 = vmatpush1.msra.mxu0 0.0
    %663 = vmatprep.subr.mxu0 0.0
    %664 = vmatpush1.msra.mxu0 0.0
    %665 = vmatprep.subr.mxu0 0.0
    %666 = vmatpush1.msra.mxu0 0.0
    %667 = vmatprep.subr.mxu0 0.0
    %668 = vmatpush1.msra.mxu0 0.0
    %669 = vmatprep.subr.mxu0 0.0
    %670 = vmatpush1.msra.mxu0 0.0
    %671 = vmatprep.subr.mxu0 0.0
    %672 = vmatpush1.msra.mxu0 0.0
    %673 = vmatprep.subr.mxu0 0.0
    %674 = vmatpush1.msra.mxu0 0.0
    %675 = vmatprep.subr.mxu0 0.0
    %676 = vmatpush1.msra.mxu0 0.0
    %677 = vmatprep.subr.mxu0 0.0
    %678 = vmatpush1.msra.mxu0 0.0
    %679 = vmatprep.subr.mxu0 0.0
    %680 = vmatpush1.msra.mxu0 0.0
    %681 = vmatprep.subr.mxu0 0.0
    %682 = vmatpush1.msra.mxu0 0.0
    %683 = vmatprep.subr.mxu0 0.0
    %684 = vmatpush1.msra.mxu0 0.0
    %685 = vmatprep.subr.mxu0 0.0
    %686 = vmatpush1.msra.mxu0 0.0
    %687 = vmatprep.subr.mxu0 0.0
    %688 = vmatpush1.msra.mxu0 0.0
    %689 = vmatprep.subr.mxu0 0.0
    %690 = vmatpush1.msra.mxu0 0.0
    %691 = vmatprep.subr.mxu0 0.0
    %692 = vmatpush1.msra.mxu0 0.0
    %693 = vmatprep.subr.mxu0 0.0
    %694 = vmatpush1.msra.mxu0 0.0
    %695 = vmatprep.subr.mxu0 0.0
    %696 = vmatpush1.msra.mxu0 0.0
    %697 = vmatprep.subr.mxu0 0.0
    %698 = vmatpush1.msra.mxu0 0.0
    %699 = vmatprep.subr.mxu0 0.0
    %700 = vmatpush1.msra.mxu0 0.0
    %701 = vmatprep.mubr.f32.mxu0 0.0
    %702 = vmatmul.mubr.f32.gmra.mrb[0].mxu0 %v635
    %v703 = vpop.f32.mrb[0].mxu0
    %v704 = vadd.f32 0.0, %v703
    %v705 = vpop.f32.mrb[0].mxu0
    %706 = vdwg.mxu0
    %v708 = vrot.slane %v704, 2
    %v710 = vadd.f32 %v286, %v708
    %v711 = vxor.u32 %v710, 2147483648
    %v712 = vmul.f32 %v711, 1.442695
    %v713 = vpow.pop %v712
    %v714 = vadd.f32 %v713, 1.0
    %v715 = vrcp.pop %v714
    %v716 = vmul.f32 1.0, %v715
    %v717 = vtanh.pop %v710
    %v719 = vrot.slane %v618, 6
    %v721 = vmul.f32 %v716, %v719
    %723 = vrot.lane.b32.xlu0 %v717, 64
    %v724 = vpop.permute.xlu0 %723
    %v726 = vmul.f32 %v716, %v724
    %728 = vrot.lane.b32.xlu0 %v726, 32
    %v729 = vpop.permute.xlu0 %728
    %v731 = vadd.f32 %v721, %v729
    %v732 = vtanh.pop %v731
    %734 = vrot.lane.b32.xlu0 %v732, 64
    %v735 = vpop.permute.xlu0 %734
    %v737 = vmul.f32 %v716, %v735
    %739 = vrot.lane.b32.xlu0 %v737, 32
    %v740 = vpop.permute.xlu0 %739
    %s742 = scalar_lea.vmem [#allocation2], 6
    %vm743 = vcmask 261126
    %744 = vst.msk [vmem:[%s742 - $0x6] sm:$0xc0] %vm743, %v740
    %v745 = vrot.slane %v737, 6
    %746 = vrot.lane.b32.xlu0 %v745, 32
    %v747 = vpop.permute.xlu0 %746
    %v748 = vsel %vm212, %v747, 0
    %750 = vmatprep.subr.mxu0 0.0
    %751 = vmatpush1.msra.mxu0 %v294
    %752 = vmatprep.subr.mxu0 0.0
    %753 = vmatpush1.msra.mxu0 %v295
    %754 = vmatprep.subr.mxu0 0.0
    %755 = vmatpush1.msra.mxu0 %v296
    %756 = vmatprep.subr.mxu0 0.0
    %757 = vmatpush1.msra.mxu0 %v297
    %758 = vmatprep.subr.mxu0 0.0
    %759 = vmatpush1.msra.mxu0 0.0
    %760 = vmatprep.subr.mxu0 0.0
    %761 = vmatpush1.msra.mxu0 0.0
    %762 = vmatprep.subr.mxu0 0.0
    %763 = vmatpush1.msra.mxu0 0.0
    %764 = vmatprep.subr.mxu0 0.0
    %765 = vmatpush1.msra.mxu0 0.0
    %766 = vmatprep.subr.mxu0 0.0
    %767 = vmatpush1.msra.mxu0 0.0
    %768 = vmatprep.subr.mxu0 0.0
    %769 = vmatpush1.msra.mxu0 0.0
    %770 = vmatprep.subr.mxu0 0.0
    %771 = vmatpush1.msra.mxu0 0.0
    %772 = vmatprep.subr.mxu0 0.0
    %773 = vmatpush1.msra.mxu0 0.0
    %774 = vmatprep.subr.mxu0 0.0
    %775 = vmatpush1.msra.mxu0 0.0
    %776 = vmatprep.subr.mxu0 0.0
    %777 = vmatpush1.msra.mxu0 0.0
    %778 = vmatprep.subr.mxu0 0.0
    %779 = vmatpush1.msra.mxu0 0.0
    %780 = vmatprep.subr.mxu0 0.0
    %781 = vmatpush1.msra.mxu0 0.0
    %782 = vmatprep.subr.mxu0 0.0
    %783 = vmatpush1.msra.mxu0 0.0
    %784 = vmatprep.subr.mxu0 0.0
    %785 = vmatpush1.msra.mxu0 0.0
    %786 = vmatprep.subr.mxu0 0.0
    %787 = vmatpush1.msra.mxu0 0.0
    %788 = vmatprep.subr.mxu0 0.0
    %789 = vmatpush1.msra.mxu0 0.0
    %790 = vmatprep.subr.mxu0 0.0
    %791 = vmatpush1.msra.mxu0 0.0
    %792 = vmatprep.subr.mxu0 0.0
    %793 = vmatpush1.msra.mxu0 0.0
    %794 = vmatprep.subr.mxu0 0.0
    %795 = vmatpush1.msra.mxu0 0.0
    %796 = vmatprep.subr.mxu0 0.0
    %797 = vmatpush1.msra.mxu0 0.0
    %798 = vmatprep.subr.mxu0 0.0
    %799 = vmatpush1.msra.mxu0 0.0
    %800 = vmatprep.subr.mxu0 0.0
    %801 = vmatpush1.msra.mxu0 0.0
    %802 = vmatprep.subr.mxu0 0.0
    %803 = vmatpush1.msra.mxu0 0.0
    %804 = vmatprep.subr.mxu0 0.0
    %805 = vmatpush1.msra.mxu0 0.0
    %806 = vmatprep.subr.mxu0 0.0
    %807 = vmatpush1.msra.mxu0 0.0
    %808 = vmatprep.subr.mxu0 0.0
    %809 = vmatpush1.msra.mxu0 0.0
    %810 = vmatprep.subr.mxu0 0.0
    %811 = vmatpush1.msra.mxu0 0.0
    %812 = vmatprep.subr.mxu0 0.0
    %813 = vmatpush1.msra.mxu0 0.0
    %814 = vmatprep.mubr.f32.mxu0 0.0
    %815 = vmatmul.mubr.f32.gmra.mrb[0].mxu0 %v748
    %v816 = vpop.f32.mrb[0].mxu0
    %v817 = vadd.f32 0.0, %v816
    %v818 = vpop.f32.mrb[0].mxu0
    %819 = vdwg.mxu0
    %v820 = vadd.f32 %v291, %v817
    %v821 = vxor.u32 %v820, 2147483648
    %v822 = vmul.f32 %v821, 1.442695
    %v823 = vpow.pop %v822
    %v824 = vadd.f32 %v823, 1.0
    %v825 = vrcp.pop %v824
    %v826 = vmul.f32 1.0, %v825
    %v827 = vtanh.pop %v820
    %v829 = vrot.slane %v731, 6
    %v831 = vmul.f32 %v826, %v829
    %833 = vrot.lane.b32.xlu0 %v827, 64
    %v834 = vpop.permute.xlu0 %833
    %v836 = vmul.f32 %v826, %v834
    %838 = vrot.lane.b32.xlu0 %v836, 32
    %v839 = vpop.permute.xlu0 %838
    %v841 = vadd.f32 %v831, %v839
    %v842 = vtanh.pop %v841
    %844 = vrot.lane.b32.xlu0 %v842, 64
    %v845 = vpop.permute.xlu0 %844
    %v847 = vmul.f32 %v826, %v845
    %849 = vrot.lane.b32.xlu0 %v847, 32
    %v850 = vpop.permute.xlu0 %849
    %s852 = scalar_lea.vmem [#allocation2], 8
    %853 = vst.msk [vmem:[%s852] sm:$0x3] %vm407, %v850
    %v854 = vsel %vm212, %v850, 0
    %856 = vmatprep.subr.mxu0 0.0
    %857 = vmatpush1.msra.mxu0 %v294
    %858 = vmatprep.subr.mxu0 0.0
    %859 = vmatpush1.msra.mxu0 %v295
    %860 = vmatprep.subr.mxu0 0.0
    %861 = vmatpush1.msra.mxu0 %v296
    %862 = vmatprep.subr.mxu0 0.0
    %863 = vmatpush1.msra.mxu0 %v297
    %864 = vmatprep.subr.mxu0 0.0
    %865 = vmatpush1.msra.mxu0 0.0
    %866 = vmatprep.subr.mxu0 0.0
    %867 = vmatpush1.msra.mxu0 0.0
    %868 = vmatprep.subr.mxu0 0.0
    %869 = vmatpush1.msra.mxu0 0.0
    %870 = vmatprep.subr.mxu0 0.0
    %871 = vmatpush1.msra.mxu0 0.0
    %872 = vmatprep.subr.mxu0 0.0
    %873 = vmatpush1.msra.mxu0 0.0
    %874 = vmatprep.subr.mxu0 0.0
    %875 = vmatpush1.msra.mxu0 0.0
    %876 = vmatprep.subr.mxu0 0.0
    %877 = vmatpush1.msra.mxu0 0.0
    %878 = vmatprep.subr.mxu0 0.0
    %879 = vmatpush1.msra.mxu0 0.0
    %880 = vmatprep.subr.mxu0 0.0
    %881 = vmatpush1.msra.mxu0 0.0
    %882 = vmatprep.subr.mxu0 0.0
    %883 = vmatpush1.msra.mxu0 0.0
    %884 = vmatprep.subr.mxu0 0.0
    %885 = vmatpush1.msra.mxu0 0.0
    %886 = vmatprep.subr.mxu0 0.0
    %887 = vmatpush1.msra.mxu0 0.0
    %888 = vmatprep.subr.mxu0 0.0
    %889 = vmatpush1.msra.mxu0 0.0
    %890 = vmatprep.subr.mxu0 0.0
    %891 = vmatpush1.msra.mxu0 0.0
    %892 = vmatprep.subr.mxu0 0.0
    %893 = vmatpush1.msra.mxu0 0.0
    %894 = vmatprep.subr.mxu0 0.0
    %895 = vmatpush1.msra.mxu0 0.0
    %896 = vmatprep.subr.mxu0 0.0
    %897 = vmatpush1.msra.mxu0 0.0
    %898 = vmatprep.subr.mxu0 0.0
    %899 = vmatpush1.msra.mxu0 0.0
    %900 = vmatprep.subr.mxu0 0.0
    %901 = vmatpush1.msra.mxu0 0.0
    %902 = vmatprep.subr.mxu0 0.0
    %903 = vmatpush1.msra.mxu0 0.0
    %904 = vmatprep.subr.mxu0 0.0
    %905 = vmatpush1.msra.mxu0 0.0
    %906 = vmatprep.subr.mxu0 0.0
    %907 = vmatpush1.msra.mxu0 0.0
    %908 = vmatprep.subr.mxu0 0.0
    %909 = vmatpush1.msra.mxu0 0.0
    %910 = vmatprep.subr.mxu0 0.0
    %911 = vmatpush1.msra.mxu0 0.0
    %912 = vmatprep.subr.mxu0 0.0
    %913 = vmatpush1.msra.mxu0 0.0
    %914 = vmatprep.subr.mxu0 0.0
    %915 = vmatpush1.msra.mxu0 0.0
    %916 = vmatprep.subr.mxu0 0.0
    %917 = vmatpush1.msra.mxu0 0.0
    %918 = vmatprep.subr.mxu0 0.0
    %919 = vmatpush1.msra.mxu0 0.0
    %920 = vmatprep.mubr.f32.mxu0 0.0
    %921 = vmatmul.mubr.f32.gmra.mrb[0].mxu0 %v854
    %v922 = vpop.f32.mrb[0].mxu0
    %v923 = vadd.f32 0.0, %v922
    %v924 = vpop.f32.mrb[0].mxu0
    %925 = vdwg.mxu0
    %v927 = vrot.slane %v923, 6
    %v929 = vadd.f32 %v291, %v927
    %v930 = vxor.u32 %v929, 2147483648
    %v931 = vmul.f32 %v930, 1.442695
    %v932 = vpow.pop %v931
    %v933 = vadd.f32 %v932, 1.0
    %v934 = vrcp.pop %v933
    %v935 = vmul.f32 1.0, %v934
    %v936 = vtanh.pop %v929
    %v938 = vrot.slane %v841, 6
    %v940 = vmul.f32 %v935, %v938
    %942 = vrot.lane.b32.xlu0 %v936, 64
    %v943 = vpop.permute.xlu0 %942
    %v945 = vmul.f32 %v935, %v943
    %947 = vrot.lane.b32.xlu0 %v945, 32
    %v948 = vpop.permute.xlu0 %947
    %v950 = vadd.f32 %v940, %v948
    %v951 = vtanh.pop %v950
    %953 = vrot.lane.b32.xlu0 %v951, 64
    %v954 = vpop.permute.xlu0 %953
    %v956 = vmul.f32 %v935, %v954
    %958 = vrot.lane.b32.xlu0 %v956, 32
    %v959 = vpop.permute.xlu0 %958
    %s961 = scalar_lea.vmem [#allocation2], 10
    %962 = vst.msk [vmem:[%s961 - $0x2] sm:$0xc] %vm517, %v959
    %v963 = vrot.slane %v956, 2
    %964 = vrot.lane.b32.xlu0 %v963, 32
    %v965 = vpop.permute.xlu0 %964
    %v966 = vsel %vm212, %v965, 0
    %968 = vmatprep.subr.mxu0 0.0
    %969 = vmatpush1.msra.mxu0 %v294
    %970 = vmatprep.subr.mxu0 0.0
    %971 = vmatpush1.msra.mxu0 %v295
    %972 = vmatprep.subr.mxu0 0.0
    %973 = vmatpush1.msra.mxu0 %v296
    %974 = vmatprep.subr.mxu0 0.0
    %975 = vmatpush1.msra.mxu0 %v297
    %976 = vmatprep.subr.mxu0 0.0
    %977 = vmatpush1.msra.mxu0 0.0
    %978 = vmatprep.subr.mxu0 0.0
    %979 = vmatpush1.msra.mxu0 0.0
    %980 = vmatprep.subr.mxu0 0.0
    %981 = vmatpush1.msra.mxu0 0.0
    %982 = vmatprep.subr.mxu0 0.0
    %983 = vmatpush1.msra.mxu0 0.0
    %984 = vmatprep.subr.mxu0 0.0
    %985 = vmatpush1.msra.mxu0 0.0
    %986 = vmatprep.subr.mxu0 0.0
    %987 = vmatpush1.msra.mxu0 0.0
    %988 = vmatprep.subr.mxu0 0.0
    %989 = vmatpush1.msra.mxu0 0.0
    %990 = vmatprep.subr.mxu0 0.0
    %991 = vmatpush1.msra.mxu0 0.0
    %992 = vmatprep.subr.mxu0 0.0
    %993 = vmatpush1.msra.mxu0 0.0
    %994 = vmatprep.subr.mxu0 0.0
    %995 = vmatpush1.msra.mxu0 0.0
    %996 = vmatprep.subr.mxu0 0.0
    %997 = vmatpush1.msra.mxu0 0.0
    %998 = vmatprep.subr.mxu0 0.0
    %999 = vmatpush1.msra.mxu0 0.0
    %1000 = vmatprep.subr.mxu0 0.0
    %1001 = vmatpush1.msra.mxu0 0.0
    %1002 = vmatprep.subr.mxu0 0.0
    %1003 = vmatpush1.msra.mxu0 0.0
    %1004 = vmatprep.subr.mxu0 0.0
    %1005 = vmatpush1.msra.mxu0 0.0
    %1006 = vmatprep.subr.mxu0 0.0
    %1007 = vmatpush1.msra.mxu0 0.0
    %1008 = vmatprep.subr.mxu0 0.0
    %1009 = vmatpush1.msra.mxu0 0.0
    %1010 = vmatprep.subr.mxu0 0.0
    %1011 = vmatpush1.msra.mxu0 0.0
    %1012 = vmatprep.subr.mxu0 0.0
    %1013 = vmatpush1.msra.mxu0 0.0
    %1014 = vmatprep.subr.mxu0 0.0
    %1015 = vmatpush1.msra.mxu0 0.0
    %1016 = vmatprep.subr.mxu0 0.0
    %1017 = vmatpush1.msra.mxu0 0.0
    %1018 = vmatprep.subr.mxu0 0.0
    %1019 = vmatpush1.msra.mxu0 0.0
    %1020 = vmatprep.subr.mxu0 0.0
    %1021 = vmatpush1.msra.mxu0 0.0
    %1022 = vmatprep.subr.mxu0 0.0
    %1023 = vmatpush1.msra.mxu0 0.0
    %1024 = vmatprep.subr.mxu0 0.0
    %1025 = vmatpush1.msra.mxu0 0.0
    %1026 = vmatprep.subr.mxu0 0.0
    %1027 = vmatpush1.msra.mxu0 0.0
    %1028 = vmatprep.subr.mxu0 0.0
    %1029 = vmatpush1.msra.mxu0 0.0
    %1030 = vmatprep.subr.mxu0 0.0
    %1031 = vmatpush1.msra.mxu0 0.0
    %1032 = vmatprep.mubr.f32.mxu0 0.0
    %1033 = vmatmul.mubr.f32.gmra.mrb[0].mxu0 %v966
    %v1034 = vpop.f32.mrb[0].mxu0
    %v1035 = vadd.f32 0.0, %v1034
    %v1036 = vpop.f32.mrb[0].mxu0
    %1037 = vdwg.mxu0
    %v1039 = vrot.slane %v1035, 4
    %v1041 = vadd.f32 %v291, %v1039
    %v1042 = vxor.u32 %v1041, 2147483648
    %v1043 = vmul.f32 %v1042, 1.442695
    %v1044 = vpow.pop %v1043
    %v1045 = vadd.f32 %v1044, 1.0
    %v1046 = vrcp.pop %v1045
    %v1047 = vmul.f32 1.0, %v1046
    %v1048 = vtanh.pop %v1041
    %v1050 = vrot.slane %v950, 6
    %v1052 = vmul.f32 %v1047, %v1050
    %1054 = vrot.lane.b32.xlu0 %v1048, 64
    %v1055 = vpop.permute.xlu0 %1054
    %v1057 = vmul.f32 %v1047, %v1055
    %1059 = vrot.lane.b32.xlu0 %v1057, 32
    %v1060 = vpop.permute.xlu0 %1059
    %v1062 = vadd.f32 %v1052, %v1060
    %v1063 = vtanh.pop %v1062
    %1065 = vrot.lane.b32.xlu0 %v1063, 64
    %v1066 = vpop.permute.xlu0 %1065
    %v1068 = vmul.f32 %v1047, %v1066
    %1070 = vrot.lane.b32.xlu0 %v1068, 32
    %v1071 = vpop.permute.xlu0 %1070
    %s1073 = scalar_lea.vmem [#allocation2], 12
    %1074 = vst.msk [vmem:[%s1073 - $0x4] sm:$0x30] %vm630, %v1071
    %v1075 = vrot.slane %v1068, 4
    %1076 = vrot.lane.b32.xlu0 %v1075, 32
    %v1077 = vpop.permute.xlu0 %1076
    %v1078 = vsel %vm212, %v1077, 0
    %1080 = vmatprep.subr.mxu0 0.0
    %1081 = vmatpush1.msra.mxu0 %v294
    %1082 = vmatprep.subr.mxu0 0.0
    %1083 = vmatpush1.msra.mxu0 %v295
    %1084 = vmatprep.subr.mxu0 0.0
    %1085 = vmatpush1.msra.mxu0 %v296
    %1086 = vmatprep.subr.mxu0 0.0
    %1087 = vmatpush1.msra.mxu0 %v297
    %1088 = vmatprep.subr.mxu0 0.0
    %1089 = vmatpush1.msra.mxu0 0.0
    %1090 = vmatprep.subr.mxu0 0.0
    %1091 = vmatpush1.msra.mxu0 0.0
    %1092 = vmatprep.subr.mxu0 0.0
    %1093 = vmatpush1.msra.mxu0 0.0
    %1094 = vmatprep.subr.mxu0 0.0
    %1095 = vmatpush1.msra.mxu0 0.0
    %1096 = vmatprep.subr.mxu0 0.0
    %1097 = vmatpush1.msra.mxu0 0.0
    %1098 = vmatprep.subr.mxu0 0.0
    %1099 = vmatpush1.msra.mxu0 0.0
    %1100 = vmatprep.subr.mxu0 0.0
    %1101 = vmatpush1.msra.mxu0 0.0
    %1102 = vmatprep.subr.mxu0 0.0
    %1103 = vmatpush1.msra.mxu0 0.0
    %1104 = vmatprep.subr.mxu0 0.0
    %1105 = vmatpush1.msra.mxu0 0.0
    %1106 = vmatprep.subr.mxu0 0.0
    %1107 = vmatpush1.msra.mxu0 0.0
    %1108 = vmatprep.subr.mxu0 0.0
    %1109 = vmatpush1.msra.mxu0 0.0
    %1110 = vmatprep.subr.mxu0 0.0
    %1111 = vmatpush1.msra.mxu0 0.0
    %1112 = vmatprep.subr.mxu0 0.0
    %1113 = vmatpush1.msra.mxu0 0.0
    %1114 = vmatprep.subr.mxu0 0.0
    %1115 = vmatpush1.msra.mxu0 0.0
    %1116 = vmatprep.subr.mxu0 0.0
    %1117 = vmatpush1.msra.mxu0 0.0
    %1118 = vmatprep.subr.mxu0 0.0
    %1119 = vmatpush1.msra.mxu0 0.0
    %1120 = vmatprep.subr.mxu0 0.0
    %1121 = vmatpush1.msra.mxu0 0.0
    %1122 = vmatprep.subr.mxu0 0.0
    %1123 = vmatpush1.msra.mxu0 0.0
    %1124 = vmatprep.subr.mxu0 0.0
    %1125 = vmatpush1.msra.mxu0 0.0
    %1126 = vmatprep.subr.mxu0 0.0
    %1127 = vmatpush1.msra.mxu0 0.0
    %1128 = vmatprep.subr.mxu0 0.0
    %1129 = vmatpush1.msra.mxu0 0.0
    %1130 = vmatprep.subr.mxu0 0.0
    %1131 = vmatpush1.msra.mxu0 0.0
    %1132 = vmatprep.subr.mxu0 0.0
    %1133 = vmatpush1.msra.mxu0 0.0
    %1134 = vmatprep.subr.mxu0 0.0
    %1135 = vmatpush1.msra.mxu0 0.0
    %1136 = vmatprep.subr.mxu0 0.0
    %1137 = vmatpush1.msra.mxu0 0.0
    %1138 = vmatprep.subr.mxu0 0.0
    %1139 = vmatpush1.msra.mxu0 0.0
    %1140 = vmatprep.subr.mxu0 0.0
    %1141 = vmatpush1.msra.mxu0 0.0
    %1142 = vmatprep.subr.mxu0 0.0
    %1143 = vmatpush1.msra.mxu0 0.0
    %1144 = vmatprep.mubr.f32.mxu0 0.0
    %1145 = vmatmul.mubr.f32.gmra.mrb[0].mxu0 %v1078
    %v1146 = vpop.f32.mrb[0].mxu0
    %v1147 = vadd.f32 0.0, %v1146
    %v1148 = vpop.f32.mrb[0].mxu0
    %1149 = vdwg.mxu0
    %v1151 = vrot.slane %v1147, 2
    %v1153 = vadd.f32 %v291, %v1151
    %v1154 = vxor.u32 %v1153, 2147483648
    %v1155 = vmul.f32 %v1154, 1.442695
    %v1156 = vpow.pop %v1155
    %v1157 = vadd.f32 %v1156, 1.0
    %v1158 = vrcp.pop %v1157
    %v1159 = vmul.f32 1.0, %v1158
    %v1160 = vtanh.pop %v1153
    %v1162 = vrot.slane %v1062, 6
    %v1164 = vmul.f32 %v1159, %v1162
    %1166 = vrot.lane.b32.xlu0 %v1160, 64
    %v1167 = vpop.permute.xlu0 %1166
    %v1169 = vmul.f32 %v1159, %v1167
    %1171 = vrot.lane.b32.xlu0 %v1169, 32
    %v1172 = vpop.permute.xlu0 %1171
    %v1174 = vadd.f32 %v1164, %v1172
    %v1175 = vtanh.pop %v1174
    %1177 = vrot.lane.b32.xlu0 %v1175, 64
    %v1178 = vpop.permute.xlu0 %1177
    %v1180 = vmul.f32 %v1159, %v1178
    %1182 = vrot.lane.b32.xlu0 %v1180, 32
    %v1183 = vpop.permute.xlu0 %1182
    %s1185 = scalar_lea.vmem [#allocation2], 14
    %1186 = vst.msk [vmem:[%s1185 - $0x6] sm:$0xc0] %vm743, %v1183
    %1187 = vst.msk [vmem:[%s12 - $0x6] sm:$0xc0] %vm743, %v1183
    %1189 = vrot.lane.b32.xlu0 %v1174, 96
    %v1190 = vpop.permute.xlu0 %1189
    %s1192 = scalar_lea.vmem %s12, 2
    %1193 = vst.msk [vmem:[%s1192 - $0x6] sm:$0xc0] %vm743, %v1190
    %v1194 = vld [vmem:[%s6] sm:$0xff]
    %v1195 = vld [vmem:[%s6 + $0x8] sm:$0xff]
    %v1196 = vld [vmem:[%s7] sm:$0xff]
    %v1197 = vld [vmem:[%s7 + $0x8] sm:$0xff]
    %v1198 = vld [vmem:[%s7 + $0x10] sm:$0xff]
    %v1199 = vld [vmem:[%s7 + $0x18] sm:$0xff]
    %v1200 = vld [vmem:[%s7 + $0x20] sm:$0xff]
    %v1201 = vld [vmem:[%s7 + $0x28] sm:$0xff]
    %v1202 = vld [vmem:[%s7 + $0x30] sm:$0xff]
    %v1203 = vld [vmem:[%s7 + $0x38] sm:$0xff]
    %v1204 = vld [vmem:[%s7 + $0x40] sm:$0xff]
    %v1205 = vld [vmem:[%s7 + $0x48] sm:$0xff]
    %v1206 = vld [vmem:[%s7 + $0x50] sm:$0xff]
    %v1207 = vld [vmem:[%s7 + $0x58] sm:$0xff]
    %v1208 = vld [vmem:[%s8] sm:$0x3]
    %v1209 = vlaneseq
    %v1210 = vshrl.u32 %v1209, 7
    %v1211 = vsub.s32 0, %v1210
    %v1212 = vrot.slane %v1208, %v1211
    %v1214 = vsel %vm212, %v1194, 0
    %v1217 = vsel %vm212, %v1195, 0
    %1219 = vmatprep.subr.mxu0 0.0
    %1220 = vmatpush1.msra.mxu0 %v1196
    %1221 = vmatprep.subr.mxu0 0.0
    %1222 = vmatpush1.msra.mxu0 %v1197
    %1223 = vmatprep.subr.mxu0 0.0
    %1224 = vmatpush1.msra.mxu0 %v1198
    %1225 = vmatprep.subr.mxu0 0.0
    %1226 = vmatpush1.msra.mxu0 %v1199
    %1227 = vmatprep.subr.mxu0 0.0
    %1228 = vmatpush1.msra.mxu0 0.0
    %1229 = vmatprep.subr.mxu0 0.0
    %1230 = vmatpush1.msra.mxu0 0.0
    %1231 = vmatprep.subr.mxu0 0.0
    %1232 = vmatpush1.msra.mxu0 0.0
    %1233 = vmatprep.subr.mxu0 0.0
    %1234 = vmatpush1.msra.mxu0 0.0
    %1235 = vmatprep.subr.mxu0 0.0
    %1236 = vmatpush1.msra.mxu0 0.0
    %1237 = vmatprep.subr.mxu0 0.0
    %1238 = vmatpush1.msra.mxu0 0.0
    %1239 = vmatprep.subr.mxu0 0.0
    %1240 = vmatpush1.msra.mxu0 0.0
    %1241 = vmatprep.subr.mxu0 0.0
    %1242 = vmatpush1.msra.mxu0 0.0
    %1243 = vmatprep.subr.mxu0 0.0
    %1244 = vmatpush1.msra.mxu0 0.0
    %1245 = vmatprep.subr.mxu0 0.0
    %1246 = vmatpush1.msra.mxu0 0.0
    %1247 = vmatprep.subr.mxu0 0.0
    %1248 = vmatpush1.msra.mxu0 0.0
    %1249 = vmatprep.subr.mxu0 0.0
    %1250 = vmatpush1.msra.mxu0 0.0
    %1251 = vmatprep.subr.mxu0 0.0
    %1252 = vmatpush1.msra.mxu0 0.0
    %1253 = vmatprep.subr.mxu0 0.0
    %1254 = vmatpush1.msra.mxu0 0.0
    %1255 = vmatprep.subr.mxu0 0.0
    %1256 = vmatpush1.msra.mxu0 0.0
    %1257 = vmatprep.subr.mxu0 0.0
    %1258 = vmatpush1.msra.mxu0 0.0
    %1259 = vmatprep.subr.mxu0 0.0
    %1260 = vmatpush1.msra.mxu0 0.0
    %1261 = vmatprep.subr.mxu0 0.0
    %1262 = vmatpush1.msra.mxu0 0.0
    %1263 = vmatprep.subr.mxu0 0.0
    %1264 = vmatpush1.msra.mxu0 0.0
    %1265 = vmatprep.subr.mxu0 0.0
    %1266 = vmatpush1.msra.mxu0 0.0
    %1267 = vmatprep.subr.mxu0 0.0
    %1268 = vmatpush1.msra.mxu0 0.0
    %1269 = vmatprep.subr.mxu0 0.0
    %1270 = vmatpush1.msra.mxu0 0.0
    %1271 = vmatprep.subr.mxu0 0.0
    %1272 = vmatpush1.msra.mxu0 0.0
    %1273 = vmatprep.subr.mxu0 0.0
    %1274 = vmatpush1.msra.mxu0 0.0
    %1275 = vmatprep.subr.mxu0 0.0
    %1276 = vmatpush1.msra.mxu0 0.0
    %1277 = vmatprep.subr.mxu0 0.0
    %1278 = vmatpush1.msra.mxu0 0.0
    %1279 = vmatprep.subr.mxu0 0.0
    %1280 = vmatpush1.msra.mxu0 0.0
    %1281 = vmatprep.subr.mxu0 0.0
    %1282 = vmatpush1.msra.mxu0 0.0
    %1283 = vmatprep.mubr.f32.mxu0 0.0
    %1284 = vmatmul.mubr.f32.gmra.mrb[0].mxu0 %v1214
    %v1285 = vpop.f32.mrb[0].mxu0
    %v1286 = vadd.f32 %v1212, %v1285
    %v1287 = vpop.f32.mrb[0].mxu0
    %1288 = vmatprep.mubr.f32.mxu0 0.0
    %1289 = vmatmul.mubr.f32.gmra.mrb[0].mxu0 %v1217
    %v1290 = vpop.f32.mrb[0].mxu0
    %v1291 = vadd.f32 %v1212, %v1290
    %v1292 = vpop.f32.mrb[0].mxu0
    %1293 = vdwg.mxu0
    %v1294 = vld [vmem:[#allocation2] sm:$0x3]
    %v1295 = vld [vmem:[#allocation2 + $0x2] sm:$0x3]
    %v1296 = vld [vmem:[#allocation2 + $0x4] sm:$0x3]
    %v1297 = vld [vmem:[#allocation2 + $0x6] sm:$0x3]
    %v1298 = vld [vmem:[#allocation2 + $0x8] sm:$0x3]
    %v1299 = vld [vmem:[#allocation2 + $0xa] sm:$0x3]
    %v1300 = vld [vmem:[#allocation2 + $0xc] sm:$0x3]
    %v1301 = vld [vmem:[#allocation2 + $0xe] sm:$0x3]
    %v1310 = vrot.slane %v1295, 7
    %vm1311 = vcmask 1041409
    %v1312 = vsel %vm1311, %v1310, %v1294
    %v1313 = vrot.slane %v1296, 6
    %vm1314 = vcmask 1042434
    %v1315 = vsel %vm1314, %v1313, %v1312
    %v1316 = vrot.slane %v1297, 5
    %vm1317 = vcmask 1043459
    %v1318 = vsel %vm1317, %v1316, %v1315
    %v1319 = vrot.slane %v1298, 4
    %vm1320 = vcmask 1044484
    %v1321 = vsel %vm1320, %v1319, %v1318
    %v1322 = vrot.slane %v1299, 3
    %vm1323 = vcmask 1045509
    %v1324 = vsel %vm1323, %v1322, %v1321
    %v1325 = vrot.slane %v1300, 2
    %vm1326 = vcmask 1046534
    %v1327 = vsel %vm1326, %v1325, %v1324
    %v1328 = vrot.slane %v1301, 1
    %vm1329 = vcmask 1047559
    %v1330 = vsel %vm1329, %v1328, %v1327
    %v1331 = vsel %vm212, %v1330, 0
    %v1334 = vsel %vm212, %v1286, 0
    %1336 = vmatprep.subr.mxu0 0.0
    %1337 = vmatpush1.xpose.msra.mxu0 %v1334
    %1338 = vmatprep.subr.mxu0 0.0
    %1339 = vmatpush1.xpose.msra.mxu0 0.0
    %1340 = vmatprep.subr.mxu0 0.0
    %1341 = vmatpush1.xpose.msra.mxu0 0.0
    %1342 = vmatprep.subr.mxu0 0.0
    %1343 = vmatpush1.xpose.msra.mxu0 0.0
    %1344 = vmatprep.subr.mxu0 0.0
    %1345 = vmatpush1.xpose.msra.mxu0 0.0
    %1346 = vmatprep.subr.mxu0 0.0
    %1347 = vmatpush1.xpose.msra.mxu0 0.0
    %1348 = vmatprep.subr.mxu0 0.0
    %1349 = vmatpush1.xpose.msra.mxu0 0.0
    %1350 = vmatprep.subr.mxu0 0.0
    %1351 = vmatpush1.xpose.msra.mxu0 0.0
    %1352 = vmatprep.subr.mxu0 0.0
    %1353 = vmatpush1.xpose.msra.mxu0 0.0
    %1354 = vmatprep.subr.mxu0 0.0
    %1355 = vmatpush1.xpose.msra.mxu0 0.0
    %1356 = vmatprep.subr.mxu0 0.0
    %1357 = vmatpush1.xpose.msra.mxu0 0.0
    %1358 = vmatprep.subr.mxu0 0.0
    %1359 = vmatpush1.xpose.msra.mxu0 0.0
    %1360 = vmatprep.subr.mxu0 0.0
    %1361 = vmatpush1.xpose.msra.mxu0 0.0
    %1362 = vmatprep.subr.mxu0 0.0
    %1363 = vmatpush1.xpose.msra.mxu0 0.0
    %1364 = vmatprep.subr.mxu0 0.0
    %1365 = vmatpush1.xpose.msra.mxu0 0.0
    %1366 = vmatprep.subr.mxu0 0.0
    %1367 = vmatpush1.xpose.msra.mxu0 0.0
    %1368 = vmatprep.subr.mxu0 0.0
    %1369 = vmatpush1.xpose.msra.mxu0 0.0
    %1370 = vmatprep.subr.mxu0 0.0
    %1371 = vmatpush1.xpose.msra.mxu0 0.0
    %1372 = vmatprep.subr.mxu0 0.0
    %1373 = vmatpush1.xpose.msra.mxu0 0.0
    %1374 = vmatprep.subr.mxu0 0.0
    %1375 = vmatpush1.xpose.msra.mxu0 0.0
    %1376 = vmatprep.subr.mxu0 0.0
    %1377 = vmatpush1.xpose.msra.mxu0 0.0
    %1378 = vmatprep.subr.mxu0 0.0
    %1379 = vmatpush1.xpose.msra.mxu0 0.0
    %1380 = vmatprep.subr.mxu0 0.0
    %1381 = vmatpush1.xpose.msra.mxu0 0.0
    %1382 = vmatprep.subr.mxu0 0.0
    %1383 = vmatpush1.xpose.msra.mxu0 0.0
    %1384 = vmatprep.subr.mxu0 0.0
    %1385 = vmatpush1.xpose.msra.mxu0 0.0
    %1386 = vmatprep.subr.mxu0 0.0
    %1387 = vmatpush1.xpose.msra.mxu0 0.0
    %1388 = vmatprep.subr.mxu0 0.0
    %1389 = vmatpush1.xpose.msra.mxu0 0.0
    %1390 = vmatprep.subr.mxu0 0.0
    %1391 = vmatpush1.xpose.msra.mxu0 0.0
    %1392 = vmatprep.subr.mxu0 0.0
    %1393 = vmatpush1.xpose.msra.mxu0 0.0
    %1394 = vmatprep.subr.mxu0 0.0
    %1395 = vmatpush1.xpose.msra.mxu0 0.0
    %1396 = vmatprep.subr.mxu0 0.0
    %1397 = vmatpush1.xpose.msra.mxu0 0.0
    %1398 = vmatprep.subr.mxu0 0.0
    %1399 = vmatpush1.xpose.msra.mxu0 0.0
    %1400 = vmatprep.mubr.f32.mxu0 0.0
    %1401 = vmatmul.mubr.f32.gmra.mrb[0].mxu0 %v1331
    %v1402 = vpop.f32.mrb[0].mxu0
    %v1403 = vadd.f32 0.0, %v1402
    %v1404 = vpop.f32.mrb[0].mxu0
    %1405 = vdwg.mxu0
    %vm1406 = vcmask 64512
    %v1407 = vsel %vm1406, %v1403, -inf
    %1408 = vmax.xlane.f32.xlu0 %v1407
    %v1409 = vpop.xlane.xlu0 %1408
    %v1410 = vsub.f32 %v1403, %v1409
    %v1411 = vmul.f32 %v1410, 1.442695
    %v1412 = vpow.pop %v1411
    %v1413 = vsel %vm1406, %v1412, 0.0
    %1414 = vadd.xlane.f32.xlu0 %v1413
    %v1415 = vpop.xlane.xlu0 %1414
    %v1416 = vrcp.pop %v1415
    %v1417 = vmul.f32 %v1412, %v1416
    %v1419 = vsel %vm1406, %v1417, 0
    %1421 = vmatprep.subr.mxu0 0.0
    %1422 = vmatpush1.msra.mxu0 %v1194
    %1423 = vmatprep.subr.mxu0 0.0
    %1424 = vmatpush1.msra.mxu0 0.0
    %1425 = vmatprep.subr.mxu0 0.0
    %1426 = vmatpush1.msra.mxu0 0.0
    %1427 = vmatprep.subr.mxu0 0.0
    %1428 = vmatpush1.msra.mxu0 0.0
    %1429 = vmatprep.subr.mxu0 0.0
    %1430 = vmatpush1.msra.mxu0 0.0
    %1431 = vmatprep.subr.mxu0 0.0
    %1432 = vmatpush1.msra.mxu0 0.0
    %1433 = vmatprep.subr.mxu0 0.0
    %1434 = vmatpush1.msra.mxu0 0.0
    %1435 = vmatprep.subr.mxu0 0.0
    %1436 = vmatpush1.msra.mxu0 0.0
    %1437 = vmatprep.subr.mxu0 0.0
    %1438 = vmatpush1.msra.mxu0 0.0
    %1439 = vmatprep.subr.mxu0 0.0
    %1440 = vmatpush1.msra.mxu0 0.0
    %1441 = vmatprep.subr.mxu0 0.0
    %1442 = vmatpush1.msra.mxu0 0.0
    %1443 = vmatprep.subr.mxu0 0.0
    %1444 = vmatpush1.msra.mxu0 0.0
    %1445 = vmatprep.subr.mxu0 0.0
    %1446 = vmatpush1.msra.mxu0 0.0
    %1447 = vmatprep.subr.mxu0 0.0
    %1448 = vmatpush1.msra.mxu0 0.0
    %1449 = vmatprep.subr.mxu0 0.0
    %1450 = vmatpush1.msra.mxu0 0.0
    %1451 = vmatprep.subr.mxu0 0.0
    %1452 = vmatpush1.msra.mxu0 0.0
    %1453 = vmatprep.subr.mxu0 0.0
    %1454 = vmatpush1.msra.mxu0 0.0
    %1455 = vmatprep.subr.mxu0 0.0
    %1456 = vmatpush1.msra.mxu0 0.0
    %1457 = vmatprep.subr.mxu0 0.0
    %1458 = vmatpush1.msra.mxu0 0.0
    %1459 = vmatprep.subr.mxu0 0.0
    %1460 = vmatpush1.msra.mxu0 0.0
    %1461 = vmatprep.subr.mxu0 0.0
    %1462 = vmatpush1.msra.mxu0 0.0
    %1463 = vmatprep.subr.mxu0 0.0
    %1464 = vmatpush1.msra.mxu0 0.0
    %1465 = vmatprep.subr.mxu0 0.0
    %1466 = vmatpush1.msra.mxu0 0.0
    %1467 = vmatprep.subr.mxu0 0.0
    %1468 = vmatpush1.msra.mxu0 0.0
    %1469 = vmatprep.subr.mxu0 0.0
    %1470 = vmatpush1.msra.mxu0 0.0
    %1471 = vmatprep.subr.mxu0 0.0
    %1472 = vmatpush1.msra.mxu0 0.0
    %1473 = vmatprep.subr.mxu0 0.0
    %1474 = vmatpush1.msra.mxu0 0.0
    %1475 = vmatprep.subr.mxu0 0.0
    %1476 = vmatpush1.msra.mxu0 0.0
    %1477 = vmatprep.subr.mxu0 0.0
    %1478 = vmatpush1.msra.mxu0 0.0
    %1479 = vmatprep.subr.mxu0 0.0
    %1480 = vmatpush1.msra.mxu0 0.0
    %1481 = vmatprep.subr.mxu0 0.0
    %1482 = vmatpush1.msra.mxu0 0.0
    %1483 = vmatprep.subr.mxu0 0.0
    %1484 = vmatpush1.msra.mxu0 0.0
    %1485 = vmatprep.mubr.f32.mxu0 0.0
    %1486 = vmatmul.mubr.f32.gmra.mrb[0].mxu0 %v1419
    %v1487 = vpop.f32.mrb[0].mxu0
    %v1488 = vadd.f32 0.0, %v1487
    %v1489 = vpop.f32.mrb[0].mxu0
    %1490 = vdwg.mxu0
    %v1491 = vrot.slane %v1294, 1
    %v1492 = vsel %vm1311, %v1295, %v1491
    %v1493 = vrot.slane %v1296, 7
    %v1494 = vsel %vm1314, %v1493, %v1492
    %v1495 = vrot.slane %v1297, 6
    %v1496 = vsel %vm1317, %v1495, %v1494
    %v1497 = vrot.slane %v1298, 5
    %v1498 = vsel %vm1320, %v1497, %v1496
    %v1499 = vrot.slane %v1299, 4
    %v1500 = vsel %vm1323, %v1499, %v1498
    %v1501 = vrot.slane %v1300, 3
    %v1502 = vsel %vm1326, %v1501, %v1500
    %v1503 = vrot.slane %v1301, 2
    %v1504 = vsel %vm1329, %v1503, %v1502
    %v1505 = vsel %vm212, %v1504, 0
    %v1508 = vsel %vm212, %v1291, 0
    %1510 = vmatprep.subr.mxu0 0.0
    %1511 = vmatpush1.xpose.msra.mxu0 %v1508
    %1512 = vmatprep.subr.mxu0 0.0
    %1513 = vmatpush1.xpose.msra.mxu0 0.0
    %1514 = vmatprep.subr.mxu0 0.0
    %1515 = vmatpush1.xpose.msra.mxu0 0.0
    %1516 = vmatprep.subr.mxu0 0.0
    %1517 = vmatpush1.xpose.msra.mxu0 0.0
    %1518 = vmatprep.subr.mxu0 0.0
    %1519 = vmatpush1.xpose.msra.mxu0 0.0
    %1520 = vmatprep.subr.mxu0 0.0
    %1521 = vmatpush1.xpose.msra.mxu0 0.0
    %1522 = vmatprep.subr.mxu0 0.0
    %1523 = vmatpush1.xpose.msra.mxu0 0.0
    %1524 = vmatprep.subr.mxu0 0.0
    %1525 = vmatpush1.xpose.msra.mxu0 0.0
    %1526 = vmatprep.subr.mxu0 0.0
    %1527 = vmatpush1.xpose.msra.mxu0 0.0
    %1528 = vmatprep.subr.mxu0 0.0
    %1529 = vmatpush1.xpose.msra.mxu0 0.0
    %1530 = vmatprep.subr.mxu0 0.0
    %1531 = vmatpush1.xpose.msra.mxu0 0.0
    %1532 = vmatprep.subr.mxu0 0.0
    %1533 = vmatpush1.xpose.msra.mxu0 0.0
    %1534 = vmatprep.subr.mxu0 0.0
    %1535 = vmatpush1.xpose.msra.mxu0 0.0
    %1536 = vmatprep.subr.mxu0 0.0
    %1537 = vmatpush1.xpose.msra.mxu0 0.0
    %1538 = vmatprep.subr.mxu0 0.0
    %1539 = vmatpush1.xpose.msra.mxu0 0.0
    %1540 = vmatprep.subr.mxu0 0.0
    %1541 = vmatpush1.xpose.msra.mxu0 0.0
    %1542 = vmatprep.subr.mxu0 0.0
    %1543 = vmatpush1.xpose.msra.mxu0 0.0
    %1544 = vmatprep.subr.mxu0 0.0
    %1545 = vmatpush1.xpose.msra.mxu0 0.0
    %1546 = vmatprep.subr.mxu0 0.0
    %1547 = vmatpush1.xpose.msra.mxu0 0.0
    %1548 = vmatprep.subr.mxu0 0.0
    %1549 = vmatpush1.xpose.msra.mxu0 0.0
    %1550 = vmatprep.subr.mxu0 0.0
    %1551 = vmatpush1.xpose.msra.mxu0 0.0
    %1552 = vmatprep.subr.mxu0 0.0
    %1553 = vmatpush1.xpose.msra.mxu0 0.0
    %1554 = vmatprep.subr.mxu0 0.0
    %1555 = vmatpush1.xpose.msra.mxu0 0.0
    %1556 = vmatprep.subr.mxu0 0.0
    %1557 = vmatpush1.xpose.msra.mxu0 0.0
    %1558 = vmatprep.subr.mxu0 0.0
    %1559 = vmatpush1.xpose.msra.mxu0 0.0
    %1560 = vmatprep.subr.mxu0 0.0
    %1561 = vmatpush1.xpose.msra.mxu0 0.0
    %1562 = vmatprep.subr.mxu0 0.0
    %1563 = vmatpush1.xpose.msra.mxu0 0.0
    %1564 = vmatprep.subr.mxu0 0.0
    %1565 = vmatpush1.xpose.msra.mxu0 0.0
    %1566 = vmatprep.subr.mxu0 0.0
    %1567 = vmatpush1.xpose.msra.mxu0 0.0
    %1568 = vmatprep.subr.mxu0 0.0
    %1569 = vmatpush1.xpose.msra.mxu0 0.0
    %1570 = vmatprep.subr.mxu0 0.0
    %1571 = vmatpush1.xpose.msra.mxu0 0.0
    %1572 = vmatprep.subr.mxu0 0.0
    %1573 = vmatpush1.xpose.msra.mxu0 0.0
    %1574 = vmatprep.mubr.f32.mxu0 0.0
    %1575 = vmatmul.mubr.f32.gmra.mrb[0].mxu0 %v1505
    %v1576 = vpop.f32.mrb[0].mxu0
    %v1577 = vadd.f32 0.0, %v1576
    %v1578 = vpop.f32.mrb[0].mxu0
    %1579 = vdwg.mxu0
    %v1580 = vsel %vm1406, %v1577, -inf
    %1581 = vmax.xlane.f32.xlu0 %v1580
    %v1582 = vpop.xlane.xlu0 %1581
    %v1583 = vsub.f32 %v1577, %v1582
    %v1584 = vmul.f32 %v1583, 1.442695
    %v1585 = vpow.pop %v1584
    %v1586 = vsel %vm1406, %v1585, 0.0
    %1587 = vadd.xlane.f32.xlu0 %v1586
    %v1588 = vpop.xlane.xlu0 %1587
    %v1589 = vrcp.pop %v1588
    %v1590 = vmul.f32 %v1585, %v1589
    %v1592 = vsel %vm1406, %v1590, 0
    %1594 = vmatprep.subr.mxu0 0.0
    %1595 = vmatpush1.msra.mxu0 %v1195
    %1596 = vmatprep.subr.mxu0 0.0
    %1597 = vmatpush1.msra.mxu0 0.0
    %1598 = vmatprep.subr.mxu0 0.0
    %1599 = vmatpush1.msra.mxu0 0.0
    %1600 = vmatprep.subr.mxu0 0.0
    %1601 = vmatpush1.msra.mxu0 0.0
    %1602 = vmatprep.subr.mxu0 0.0
    %1603 = vmatpush1.msra.mxu0 0.0
    %1604 = vmatprep.subr.mxu0 0.0
    %1605 = vmatpush1.msra.mxu0 0.0
    %1606 = vmatprep.subr.mxu0 0.0
    %1607 = vmatpush1.msra.mxu0 0.0
    %1608 = vmatprep.subr.mxu0 0.0
    %1609 = vmatpush1.msra.mxu0 0.0
    %1610 = vmatprep.subr.mxu0 0.0
    %1611 = vmatpush1.msra.mxu0 0.0
    %1612 = vmatprep.subr.mxu0 0.0
    %1613 = vmatpush1.msra.mxu0 0.0
    %1614 = vmatprep.subr.mxu0 0.0
    %1615 = vmatpush1.msra.mxu0 0.0
    %1616 = vmatprep.subr.mxu0 0.0
    %1617 = vmatpush1.msra.mxu0 0.0
    %1618 = vmatprep.subr.mxu0 0.0
    %1619 = vmatpush1.msra.mxu0 0.0
    %1620 = vmatprep.subr.mxu0 0.0
    %1621 = vmatpush1.msra.mxu0 0.0
    %1622 = vmatprep.subr.mxu0 0.0
    %1623 = vmatpush1.msra.mxu0 0.0
    %1624 = vmatprep.subr.mxu0 0.0
    %1625 = vmatpush1.msra.mxu0 0.0
    %1626 = vmatprep.subr.mxu0 0.0
    %1627 = vmatpush1.msra.mxu0 0.0
    %1628 = vmatprep.subr.mxu0 0.0
    %1629 = vmatpush1.msra.mxu0 0.0
    %1630 = vmatprep.subr.mxu0 0.0
    %1631 = vmatpush1.msra.mxu0 0.0
    %1632 = vmatprep.subr.mxu0 0.0
    %1633 = vmatpush1.msra.mxu0 0.0
    %1634 = vmatprep.subr.mxu0 0.0
    %1635 = vmatpush1.msra.mxu0 0.0
    %1636 = vmatprep.subr.mxu0 0.0
    %1637 = vmatpush1.msra.mxu0 0.0
    %1638 = vmatprep.subr.mxu0 0.0
    %1639 = vmatpush1.msra.mxu0 0.0
    %1640 = vmatprep.subr.mxu0 0.0
    %1641 = vmatpush1.msra.mxu0 0.0
    %1642 = vmatprep.subr.mxu0 0.0
    %1643 = vmatpush1.msra.mxu0 0.0
    %1644 = vmatprep.subr.mxu0 0.0
    %1645 = vmatpush1.msra.mxu0 0.0
    %1646 = vmatprep.subr.mxu0 0.0
    %1647 = vmatpush1.msra.mxu0 0.0
    %1648 = vmatprep.subr.mxu0 0.0
    %1649 = vmatpush1.msra.mxu0 0.0
    %1650 = vmatprep.subr.mxu0 0.0
    %1651 = vmatpush1.msra.mxu0 0.0
    %1652 = vmatprep.subr.mxu0 0.0
    %1653 = vmatpush1.msra.mxu0 0.0
    %1654 = vmatprep.subr.mxu0 0.0
    %1655 = vmatpush1.msra.mxu0 0.0
    %1656 = vmatprep.subr.mxu0 0.0
    %1657 = vmatpush1.msra.mxu0 0.0
    %1658 = vmatprep.mubr.f32.mxu0 0.0
    %1659 = vmatmul.mubr.f32.gmra.mrb[0].mxu0 %v1592
    %v1660 = vpop.f32.mrb[0].mxu0
    %v1661 = vadd.f32 0.0, %v1660
    %v1662 = vpop.f32.mrb[0].mxu0
    %1663 = vdwg.mxu0
    %1664 = vmatprep.subr.mxu0 0.0
    %1665 = vmatpush1.msra.mxu0 %v1204
    %1666 = vmatprep.subr.mxu0 0.0
    %1667 = vmatpush1.msra.mxu0 %v1205
    %1668 = vmatprep.subr.mxu0 0.0
    %1669 = vmatpush1.msra.mxu0 %v1206
    %1670 = vmatprep.subr.mxu0 0.0
    %1671 = vmatpush1.msra.mxu0 %v1207
    %1672 = vmatprep.subr.mxu0 0.0
    %1673 = vmatpush1.msra.mxu0 0.0
    %1674 = vmatprep.subr.mxu0 0.0
    %1675 = vmatpush1.msra.mxu0 0.0
    %1676 = vmatprep.subr.mxu0 0.0
    %1677 = vmatpush1.msra.mxu0 0.0
    %1678 = vmatprep.subr.mxu0 0.0
    %1679 = vmatpush1.msra.mxu0 0.0
    %1680 = vmatprep.subr.mxu0 0.0
    %1681 = vmatpush1.msra.mxu0 0.0
    %1682 = vmatprep.subr.mxu0 0.0
    %1683 = vmatpush1.msra.mxu0 0.0
    %1684 = vmatprep.subr.mxu0 0.0
    %1685 = vmatpush1.msra.mxu0 0.0
    %1686 = vmatprep.subr.mxu0 0.0
    %1687 = vmatpush1.msra.mxu0 0.0
    %1688 = vmatprep.subr.mxu0 0.0
    %1689 = vmatpush1.msra.mxu0 0.0
    %1690 = vmatprep.subr.mxu0 0.0
    %1691 = vmatpush1.msra.mxu0 0.0
    %1692 = vmatprep.subr.mxu0 0.0
    %1693 = vmatpush1.msra.mxu0 0.0
    %1694 = vmatprep.subr.mxu0 0.0
    %1695 = vmatpush1.msra.mxu0 0.0
    %1696 = vmatprep.subr.mxu0 0.0
    %1697 = vmatpush1.msra.mxu0 0.0
    %1698 = vmatprep.subr.mxu0 0.0
    %1699 = vmatpush1.msra.mxu0 0.0
    %1700 = vmatprep.subr.mxu0 0.0
    %1701 = vmatpush1.msra.mxu0 0.0
    %1702 = vmatprep.subr.mxu0 0.0
    %1703 = vmatpush1.msra.mxu0 0.0
    %1704 = vmatprep.subr.mxu0 0.0
    %1705 = vmatpush1.msra.mxu0 0.0
    %1706 = vmatprep.subr.mxu0 0.0
    %1707 = vmatpush1.msra.mxu0 0.0
    %1708 = vmatprep.subr.mxu0 0.0
    %1709 = vmatpush1.msra.mxu0 0.0
    %1710 = vmatprep.subr.mxu0 0.0
    %1711 = vmatpush1.msra.mxu0 0.0
    %1712 = vmatprep.subr.mxu0 0.0
    %1713 = vmatpush1.msra.mxu0 0.0
    %1714 = vmatprep.subr.mxu0 0.0
    %1715 = vmatpush1.msra.mxu0 0.0
    %1716 = vmatprep.subr.mxu0 0.0
    %1717 = vmatpush1.msra.mxu0 0.0
    %1718 = vmatprep.subr.mxu0 0.0
    %1719 = vmatpush1.msra.mxu0 0.0
    %1720 = vmatprep.subr.mxu0 0.0
    %1721 = vmatpush1.msra.mxu0 0.0
    %1722 = vmatprep.subr.mxu0 0.0
    %1723 = vmatpush1.msra.mxu0 0.0
    %1724 = vmatprep.subr.mxu0 0.0
    %1725 = vmatpush1.msra.mxu0 0.0
    %1726 = vmatprep.subr.mxu0 0.0
    %1727 = vmatpush1.msra.mxu0 0.0
    %1728 = vmatprep.mubr.f32.mxu0 0.0
    %1729 = vmatmul.mubr.f32.gmra.mrb[0].mxu0 %v1331
    %v1730 = vpop.f32.mrb[0].mxu0
    %v1731 = vadd.f32 0.0, %v1730
    %v1732 = vpop.f32.mrb[0].mxu0
    %1733 = vmatprep.mubr.f32.mxu0 0.0
    %1734 = vmatmul.mubr.f32.gmra.mrb[0].mxu0 %v1505
    %v1735 = vpop.f32.mrb[0].mxu0
    %v1736 = vadd.f32 0.0, %v1735
    %v1737 = vpop.f32.mrb[0].mxu0
    %1738 = vdwg.mxu0
    %v1740 = vsel %vm212, %v1488, 0
    %v1743 = vsel %vm212, %v1661, 0
    %1745 = vmatprep.subr.mxu0 0.0
    %1746 = vmatpush1.msra.mxu0 %v1200
    %1747 = vmatprep.subr.mxu0 0.0
    %1748 = vmatpush1.msra.mxu0 %v1201
    %1749 = vmatprep.subr.mxu0 0.0
    %1750 = vmatpush1.msra.mxu0 %v1202
    %1751 = vmatprep.subr.mxu0 0.0
    %1752 = vmatpush1.msra.mxu0 %v1203
    %1753 = vmatprep.subr.mxu0 0.0
    %1754 = vmatpush1.msra.mxu0 0.0
    %1755 = vmatprep.subr.mxu0 0.0
    %1756 = vmatpush1.msra.mxu0 0.0
    %1757 = vmatprep.subr.mxu0 0.0
    %1758 = vmatpush1.msra.mxu0 0.0
    %1759 = vmatprep.subr.mxu0 0.0
    %1760 = vmatpush1.msra.mxu0 0.0
    %1761 = vmatprep.subr.mxu0 0.0
    %1762 = vmatpush1.msra.mxu0 0.0
    %1763 = vmatprep.subr.mxu0 0.0
    %1764 = vmatpush1.msra.mxu0 0.0
    %1765 = vmatprep.subr.mxu0 0.0
    %1766 = vmatpush1.msra.mxu0 0.0
    %1767 = vmatprep.subr.mxu0 0.0
    %1768 = vmatpush1.msra.mxu0 0.0
    %1769 = vmatprep.subr.mxu0 0.0
    %1770 = vmatpush1.msra.mxu0 0.0
    %1771 = vmatprep.subr.mxu0 0.0
    %1772 = vmatpush1.msra.mxu0 0.0
    %1773 = vmatprep.subr.mxu0 0.0
    %1774 = vmatpush1.msra.mxu0 0.0
    %1775 = vmatprep.subr.mxu0 0.0
    %1776 = vmatpush1.msra.mxu0 0.0
    %1777 = vmatprep.subr.mxu0 0.0
    %1778 = vmatpush1.msra.mxu0 0.0
    %1779 = vmatprep.subr.mxu0 0.0
    %1780 = vmatpush1.msra.mxu0 0.0
    %1781 = vmatprep.subr.mxu0 0.0
    %1782 = vmatpush1.msra.mxu0 0.0
    %1783 = vmatprep.subr.mxu0 0.0
    %1784 = vmatpush1.msra.mxu0 0.0
    %1785 = vmatprep.subr.mxu0 0.0
    %1786 = vmatpush1.msra.mxu0 0.0
    %1787 = vmatprep.subr.mxu0 0.0
    %1788 = vmatpush1.msra.mxu0 0.0
    %1789 = vmatprep.subr.mxu0 0.0
    %1790 = vmatpush1.msra.mxu0 0.0
    %1791 = vmatprep.subr.mxu0 0.0
    %1792 = vmatpush1.msra.mxu0 0.0
    %1793 = vmatprep.subr.mxu0 0.0
    %1794 = vmatpush1.msra.mxu0 0.0
    %1795 = vmatprep.subr.mxu0 0.0
    %1796 = vmatpush1.msra.mxu0 0.0
    %1797 = vmatprep.subr.mxu0 0.0
    %1798 = vmatpush1.msra.mxu0 0.0
    %1799 = vmatprep.subr.mxu0 0.0
    %1800 = vmatpush1.msra.mxu0 0.0
    %1801 = vmatprep.subr.mxu0 0.0
    %1802 = vmatpush1.msra.mxu0 0.0
    %1803 = vmatprep.subr.mxu0 0.0
    %1804 = vmatpush1.msra.mxu0 0.0
    %1805 = vmatprep.subr.mxu0 0.0
    %1806 = vmatpush1.msra.mxu0 0.0
    %1807 = vmatprep.subr.mxu0 0.0
    %1808 = vmatpush1.msra.mxu0 0.0
    %1809 = vmatprep.mubr.f32.mxu0 0.0
    %1810 = vmatmul.mubr.f32.gmra.mrb[0].mxu0 %v1740
    %v1811 = vpop.f32.mrb[0].mxu0
    %v1812 = vadd.f32 %v1731, %v1811
    %v1813 = vpop.f32.mrb[0].mxu0
    %1814 = vmatprep.mubr.f32.mxu0 0.0
    %1815 = vmatmul.mubr.f32.gmra.mrb[0].mxu0 %v1743
    %v1816 = vpop.f32.mrb[0].mxu0
    %v1817 = vadd.f32 %v1736, %v1816
    %v1818 = vpop.f32.mrb[0].mxu0
    %1819 = vdwg.mxu0
    %v1820 = vlaneseq
    %v1821 = vshrl.u32 %v1820, 7
    %v1822 = vsub.s32 1, %v1821
    %v1823 = vrot.slane %v1208, %v1822
    %v1824 = vadd.f32 %v1812, %v1823
    %v1825 = vadd.f32 %v1817, %v1823
    %v1826 = vtanh.pop %v1824
    %v1827 = vtanh.pop %v1825
    %v1828 = vld [vmem:[#allocation8] sm:$0xff]
    %v1829 = vld [vmem:[#allocation8 + $0x8] sm:$0xff]
    %v1830 = vld [vmem:[#allocation8 + $0x10] sm:$0xff]
    %v1831 = vld [vmem:[#allocation8 + $0x18] sm:$0xff]
    %v1832 = vld [vmem:[%s10] sm:$0x1]
    %v1834 = vlaneseq
    %v1835 = vshrl.u32 %v1834, 7
    %v1836 = vsub.s32 0, %v1835
    %v1837 = vrot.slane %v1832, %v1836
    %v1840 = vsel %vm212, %v1826, 0
    %v1843 = vsel %vm212, %v1827, 0
    %1845 = vmatprep.subr.mxu0 0.0
    %1846 = vmatpush1.msra.mxu0 %v1828
    %1847 = vmatprep.subr.mxu0 0.0
    %1848 = vmatpush1.msra.mxu0 %v1829
    %1849 = vmatprep.subr.mxu0 0.0
    %1850 = vmatpush1.msra.mxu0 %v1830
    %1851 = vmatprep.subr.mxu0 0.0
    %1852 = vmatpush1.msra.mxu0 %v1831
    %1853 = vmatprep.subr.mxu0 0.0
    %1854 = vmatpush1.msra.mxu0 0.0
    %1855 = vmatprep.subr.mxu0 0.0
    %1856 = vmatpush1.msra.mxu0 0.0
    %1857 = vmatprep.subr.mxu0 0.0
    %1858 = vmatpush1.msra.mxu0 0.0
    %1859 = vmatprep.subr.mxu0 0.0
    %1860 = vmatpush1.msra.mxu0 0.0
    %1861 = vmatprep.subr.mxu0 0.0
    %1862 = vmatpush1.msra.mxu0 0.0
    %1863 = vmatprep.subr.mxu0 0.0
    %1864 = vmatpush1.msra.mxu0 0.0
    %1865 = vmatprep.subr.mxu0 0.0
    %1866 = vmatpush1.msra.mxu0 0.0
    %1867 = vmatprep.subr.mxu0 0.0
    %1868 = vmatpush1.msra.mxu0 0.0
    %1869 = vmatprep.subr.mxu0 0.0
    %1870 = vmatpush1.msra.mxu0 0.0
    %1871 = vmatprep.subr.mxu0 0.0
    %1872 = vmatpush1.msra.mxu0 0.0
    %1873 = vmatprep.subr.mxu0 0.0
    %1874 = vmatpush1.msra.mxu0 0.0
    %1875 = vmatprep.subr.mxu0 0.0
    %1876 = vmatpush1.msra.mxu0 0.0
    %1877 = vmatprep.subr.mxu0 0.0
    %1878 = vmatpush1.msra.mxu0 0.0
    %1879 = vmatprep.subr.mxu0 0.0
    %1880 = vmatpush1.msra.mxu0 0.0
    %1881 = vmatprep.subr.mxu0 0.0
    %1882 = vmatpush1.msra.mxu0 0.0
    %1883 = vmatprep.subr.mxu0 0.0
    %1884 = vmatpush1.msra.mxu0 0.0
    %1885 = vmatprep.subr.mxu0 0.0
    %1886 = vmatpush1.msra.mxu0 0.0
    %1887 = vmatprep.subr.mxu0 0.0
    %1888 = vmatpush1.msra.mxu0 0.0
    %1889 = vmatprep.subr.mxu0 0.0
    %1890 = vmatpush1.msra.mxu0 0.0
    %1891 = vmatprep.subr.mxu0 0.0
    %1892 = vmatpush1.msra.mxu0 0.0
    %1893 = vmatprep.subr.mxu0 0.0
    %1894 = vmatpush1.msra.mxu0 0.0
    %1895 = vmatprep.subr.mxu0 0.0
    %1896 = vmatpush1.msra.mxu0 0.0
    %1897 = vmatprep.subr.mxu0 0.0
    %1898 = vmatpush1.msra.mxu0 0.0
    %1899 = vmatprep.subr.mxu0 0.0
    %1900 = vmatpush1.msra.mxu0 0.0
    %1901 = vmatprep.subr.mxu0 0.0
    %1902 = vmatpush1.msra.mxu0 0.0
    %1903 = vmatprep.subr.mxu0 0.0
    %1904 = vmatpush1.msra.mxu0 0.0
    %1905 = vmatprep.subr.mxu0 0.0
    %1906 = vmatpush1.msra.mxu0 0.0
    %1907 = vmatprep.subr.mxu0 0.0
    %1908 = vmatpush1.msra.mxu0 0.0
    %1909 = vmatprep.mubr.f32.mxu0 0.0
    %1910 = vmatmul.mubr.f32.gmra.mrb[0].mxu0 %v1840
    %v1911 = vpop.f32.mrb[0].mxu0
    %v1912 = vadd.f32 %v1837, %v1911
    %v1913 = vpop.f32.mrb[0].mxu0
    %1914 = vmatprep.mubr.f32.mxu0 0.0
    %1915 = vmatmul.mubr.f32.gmra.mrb[0].mxu0 %v1843
    %v1916 = vpop.f32.mrb[0].mxu0
    %v1917 = vadd.f32 %v1837, %v1916
    %v1918 = vpop.f32.mrb[0].mxu0
    %1919 = vdwg.mxu0
    %v1920 = vsel %vm119, %v1912, -inf
    %1921 = vmax.xlane.f32.xlu0 %v1920
    %v1922 = vpop.xlane.xlu0 %1921
    %v1923 = vsel %vm119, %v1917, -inf
    %1924 = vmax.xlane.f32.xlu0 %v1923
    %v1925 = vpop.xlane.xlu0 %1924
    %v1926 = vsub.f32 %v1912, %v1922
    %v1927 = vsub.f32 %v1917, %v1925
    %v1928 = vmul.f32 %v1926, 1.442695
    %v1929 = vpow.pop %v1928
    %v1930 = vmul.f32 %v1927, 1.442695
    %v1931 = vpow.pop %v1930
    %v1932 = vsel %vm119, %v1929, 0.0
    %1933 = vadd.xlane.f32.xlu0 %v1932
    %v1934 = vpop.xlane.xlu0 %1933
    %v1935 = vsel %vm119, %v1931, 0.0
    %1936 = vadd.xlane.f32.xlu0 %v1935
    %v1937 = vpop.xlane.xlu0 %1936
    %v1938 = vrcp.pop %v1934
    %v1939 = vrcp.pop %v1937
    %v1940 = vmul.f32 %v1929, %v1938
    %v1941 = vmul.f32 %v1931, %v1939
    %1943 = vrot.lane.b32.xlu0 %v1941, 64
    %v1944 = vpop.permute.xlu0 %1943
    %v1946 = vsel %vm119, %v1940, %v1944
    %1947 = vst [vmem:[%s11] sm:$0xff] %v1946
    // Predicated region
    $region62: #{decoder_forward.1} parent=1 // pred_check
      _
    $region63: #{decoder_forward.1} parent=1 // pred_check_branch
      %1949 = sbr.rel (0) target = $region65
    $region64: #{decoder_forward.1} parent=1 // pred_region
      _
    $region65: #{decoder_forward.1} parent=1 // pred_fallthru
      _
    // Predicated region
    $region66: #{decoder_forward.1} parent=1 // pred_check
      _
    $region67: #{decoder_forward.1} parent=1 // pred_check_branch
      %1951 = sbr.rel (0) target = $region69
    $region68: #{decoder_forward.1} parent=1 // pred_region
      _
    $region69: #{decoder_forward.1} parent=1 // pred_fallthru
      _
    // Predicated region
    $region70: #{decoder_forward.1} parent=1 // pred_check
      _
    $region71: #{decoder_forward.1} parent=1 // pred_check_branch
      %1953 = sbr.rel (0) target = $region73
    $region72: #{decoder_forward.1} parent=1 // pred_region
      _
    $region73: #{decoder_forward.1} parent=1 // pred_fallthru
      _
    // Predicated region
    $region74: #{decoder_forward.1} parent=1 // pred_check
      _
    $region75: #{decoder_forward.1} parent=1 // pred_check_branch
      %1955 = sbr.rel (0) target = $region77
    $region76: #{decoder_forward.1} parent=1 // pred_region
      _
    $region77: #{decoder_forward.1} parent=1 // pred_fallthru
      _
    %1956 = vsyncpa [#allocation4], 1
    %1957 = vsyncpa [#allocation6], 1
    %1958 = vsyncpa [#allocation9], 1

</llo_original>
